<compile_context>
chip_gen: v6e
topology: v6e:2x2x1
jax: 0.10.0
libtpu: 0.0.40
codegen_flags: <defaults>
</compile_context>

<pallas_src>
import functools

import jax
import jax.numpy as jnp
import numpy as np
from jax.experimental import pallas as pl
from jax.experimental.pallas import tpu as pltpu


# ----------------------------------------------------------------------------
# BN folding + constant gather matrices (built at trace time with numpy)
# ----------------------------------------------------------------------------
def fold_bn(gamma, beta, mean, var, eps):
    scale = gamma / jnp.sqrt(var + eps)
    bias = beta - mean * scale
    return scale, bias


def spatial_gather_mats(H, W, stride, dilation):
    """Constant 0/1 matrices folding the 3x3 conv's stride / dilation /
    zero-padding (and the shortcut's spatial stride) into plain matmuls.

    G[dh*3+dw] @ h1_flat gathers the (dh, dw) tap for every output position
    (all-zero rows implement the zero padding); S @ x_flat gathers the strided
    shortcut positions.
    """
    Ho = (H - 1) // stride + 1
    Wo = (W - 1) // stride + 1
    G = np.zeros((9, Ho * Wo, H * W), np.float32)
    S = np.zeros((Ho * Wo, H * W), np.float32)
    for ho in range(Ho):
        for wo in range(Wo):
            o = ho * Wo + wo
            S[o, ho * stride * W + wo * stride] = 1.0
            for dh in range(3):
                for dw in range(3):
                    hi = ho * stride + (dh - 1) * dilation
                    wi = wo * stride + (dw - 1) * dilation
                    if 0 <= hi < H and 0 <= wi < W:
                        G[dh * 3 + dw, o, hi * W + wi] = 1.0
    return G, S, Ho, Wo


# ----------------------------------------------------------------------------
# Fused ResBlock kernel: one (n, t) frame per grid step
# ----------------------------------------------------------------------------
def _res_block_kernel(*refs, temp_k):
    x_taps = refs[:temp_k]                     # temp_k shifted views of padded x
    (wa_ref, ba_ref, g_ref, wb_ref, bb_ref,
     wc_ref, ssel_ref, w1_ref, bcc_ref, out_ref) = refs[temp_k:]

    f32, bf16 = jnp.float32, jnp.bfloat16
    hw = x_taps[0].shape[2]
    c_inner = wa_ref.shape[2]
    n_out = g_ref.shape[1]

    # ---- branch2.a : [Tk,1,1] conv (+ folded BN) + ReLU -----------------------
    acc_a = jnp.zeros((hw, c_inner), f32)
    for dt in range(temp_k):
        acc_a = acc_a + jnp.dot(x_taps[dt][0, 0], wa_ref[dt],
                                preferred_element_type=f32)
    h1 = jnp.maximum(acc_a + ba_ref[...], 0.0).astype(bf16)

    # ---- branch2.b : [1,3,3] conv, stride/dilation/pad via gather matmuls -----
    acc_b = jnp.zeros((n_out, c_inner), f32)
    for t in range(9):
        tap = jnp.dot(g_ref[t], h1, preferred_element_type=f32)   # exact gather
        acc_b = acc_b + jnp.dot(tap.astype(bf16), wb_ref[t],
                                preferred_element_type=f32)
    h2 = jnp.maximum(acc_b + bb_ref[...], 0.0).astype(bf16)

    # ---- branch2.c : 1x1x1 conv (+ folded BN) ---------------------------------
    f_x = jnp.dot(h2, wc_ref[...], preferred_element_type=f32)

    # ---- branch1 (shortcut) : 1x1x1 conv, spatial stride via gather -----------
    x_c = x_taps[temp_k // 2][0, 0]            # centre (un-shifted) frame
    x_s = jnp.dot(ssel_ref[...], x_c, preferred_element_type=f32).astype(bf16)
    sc = jnp.dot(x_s, w1_ref[...], preferred_element_type=f32)

    # ---- residual add + combined (c + shortcut) bias + ReLU, f32 epilogue -----
    out_ref[0, 0] = jnp.maximum(f_x + sc + bcc_ref[...], 0.0).astype(out_ref.dtype)


# ----------------------------------------------------------------------------
# ResBlock forward (eval mode)
# ----------------------------------------------------------------------------
def res_block_forward(x_ncthw, params, *, temp_k, stride, dilation, eps):
    N, C_in, T, H, W = x_ncthw.shape
    pt = temp_k // 2

    # channels-last rows (N, T, H*W, C_in), temporally zero-padded, bf16 for MXU
    x = jnp.transpose(x_ncthw, (0, 2, 3, 4, 1)).reshape(N, T, H * W, C_in)
    x_pad = jnp.pad(x, ((0, 0), (pt, pt), (0, 0), (0, 0))).astype(jnp.bfloat16)

    # fold BN scales into the conv weights (f32 fold, then cast weights to bf16)
    sa, ba = fold_bn(*params["bn_a"], eps)
    sb, bb = fold_bn(*params["bn_b"], eps)
    sc_, bc = fold_bn(*params["bn_c"], eps)
    s1, b1 = fold_bn(*params["bn_1"], eps)

    wa = params["wa"]                          # (C_inner, C_in, Tk, 1, 1)
    C_inner = wa.shape[0]
    wa_taps = (jnp.transpose(wa[:, :, :, 0, 0], (2, 1, 0))
               * sa[None, None, :]).astype(jnp.bfloat16)        # (Tk, C_in, C_inner)

    wb = params["wb"]                          # (C_inner, C_inner, 1, 3, 3)
    wb_taps = (jnp.transpose(wb[:, :, 0], (2, 3, 1, 0)).reshape(9, C_inner, C_inner)
               * sb[None, None, :]).astype(jnp.bfloat16)        # (9, Ci, Ci)

    wc = params["wc"]                          # (C_out, C_inner, 1, 1, 1)
    C_out = wc.shape[0]
    wc_mat = (jnp.transpose(wc[:, :, 0, 0, 0], (1, 0))
              * sc_[None, :]).astype(jnp.bfloat16)              # (C_inner, C_out)

    w1 = params["w1"]                          # (C_out, C_in, 1, 1, 1)
    w1_mat = (jnp.transpose(w1[:, :, 0, 0, 0], (1, 0))
              * s1[None, :]).astype(jnp.bfloat16)               # (C_in, C_out)

    ba2 = ba.reshape(1, C_inner).astype(jnp.float32)
    bb2 = bb.reshape(1, C_inner).astype(jnp.float32)
    bcc = (bc + b1).reshape(1, C_out).astype(jnp.float32)       # combined bias

    g_np, s_np, Ho, Wo = spatial_gather_mats(H, W, stride, dilation)
    g_mat = jnp.asarray(g_np, jnp.bfloat16)                     # (9, Ho*Wo, H*W)
    s_mat = jnp.asarray(s_np, jnp.bfloat16)                     # (Ho*Wo, H*W)

    HW, HoWo = H * W, Ho * Wo

    def tap_spec(dt):
        # temporal tap dt of conv `a`: shifted view of the padded input
        return pl.BlockSpec((1, 1, HW, C_in),
                            lambda n, t, dt=dt: (n, t + dt, 0, 0))

    def full_spec(shape):
        nd = len(shape)
        return pl.BlockSpec(shape, lambda n, t, _nd=nd: (0,) * _nd)

    in_specs = ([tap_spec(dt) for dt in range(temp_k)] +
                [full_spec(wa_taps.shape), full_spec(ba2.shape),
                 full_spec(g_mat.shape), full_spec(wb_taps.shape),
                 full_spec(bb2.shape), full_spec(wc_mat.shape),
                 full_spec(s_mat.shape), full_spec(w1_mat.shape),
                 full_spec(bcc.shape)])

    out = pl.pallas_call(
        functools.partial(_res_block_kernel, temp_k=temp_k),
        out_shape=jax.ShapeDtypeStruct((N, T, HoWo, C_out), jnp.float32),
        grid_spec=pltpu.PrefetchScalarGridSpec(
            num_scalar_prefetch=0,
            grid=(N, T),
            in_specs=in_specs,
            out_specs=pl.BlockSpec((1, 1, HoWo, C_out), lambda n, t: (n, t, 0, 0)),
        ),
        compiler_params=pltpu.CompilerParams(
            dimension_semantics=("parallel", "parallel")),
    )(*([x_pad] * temp_k + [wa_taps, ba2, g_mat, wb_taps, bb2,
                            wc_mat, s_mat, w1_mat, bcc]))

    out = out.reshape(N, T, Ho, Wo, C_out)
    return jnp.transpose(out, (0, 4, 1, 2, 3))                  # -> NCTHW


# ----------------------------------------------------------------------------
# Pure-JAX reference (f32, lax.conv_general_dilated) for validation
# ----------------------------------------------------------------------------
def _conv3d(x, w, strides, padding, dilation=(1, 1, 1)):
    return jax.lax.conv_general_dilated(
        x, w, window_strides=strides, padding=padding, rhs_dilation=dilation,
        dimension_numbers=("NCDHW", "OIDHW", "NCDHW"),
        precision=jax.lax.Precision.HIGHEST)


def _bn_ref(y, gamma, beta, mean, var, eps):
    s = gamma / jnp.sqrt(var + eps)
    b = beta - mean * s
    return y * s[None, :, None, None, None] + b[None, :, None, None, None]


def res_block_reference(x, p, *, temp_k, stride, dilation, eps):
    pad_t = temp_k // 2
    h = _conv3d(x, p["wa"], (1, 1, 1), [(pad_t, pad_t), (0, 0), (0, 0)])
    h = jax.nn.relu(_bn_ref(h, *p["bn_a"], eps))
    h = _conv3d(h, p["wb"], (1, stride, stride),
                [(0, 0), (dilation, dilation), (dilation, dilation)],
                dilation=(1, dilation, dilation))
    h = jax.nn.relu(_bn_ref(h, *p["bn_b"], eps))
    h = _conv3d(h, p["wc"], (1, 1, 1), [(0, 0), (0, 0), (0, 0)])
    fx = _bn_ref(h, *p["bn_c"], eps)
    sc = _conv3d(x, p["w1"], (1, stride, stride), [(0, 0), (0, 0), (0, 0)])
    sc = _bn_ref(sc, *p["bn_1"], eps)
    return jax.nn.relu(sc + fx)


# ----------------------------------------------------------------------------
# main
# ----------------------------------------------------------------------------
if __name__ == "__main__":
    # ResBlock(dim_in=4, dim_out=16, temp_kernel_size=3, stride=2,
    #          trans_func=BottleneckTransform, dim_inner=8, num_groups=1,
    #          stride_1x1=False, dilation=1), eval mode.
    dim_in, dim_out, dim_inner = 4, 16, 8
    temp_k, stride, dilation, eps = 3, 2, 1, 1e-5
    N, T, H, W = 2, 4, 8, 8

    key = jax.random.PRNGKey(0)
    ks = jax.random.split(key, 32)
    ki = iter(range(32))

    def nrm(shape, scale=0.1):
        return (scale * jax.random.normal(ks[next(ki)], shape)).astype(jnp.float32)

    def bn_params(c):
        gamma = 1.0 + 0.1 * jax.random.normal(ks[next(ki)], (c,))
        beta = 0.1 * jax.random.normal(ks[next(ki)], (c,))
        mean = 0.1 * jax.random.normal(ks[next(ki)], (c,))
        var = jax.random.uniform(ks[next(ki)], (c,), minval=0.5, maxval=1.5)
        return (gamma.astype(jnp.float32), beta.astype(jnp.float32),
                mean.astype(jnp.float32), var.astype(jnp.float32))

    params = {
        "wa": nrm((dim_inner, dim_in, temp_k, 1, 1)),
        "bn_a": bn_params(dim_inner),
        "wb": nrm((dim_inner, dim_inner, 1, 3, 3)),
        "bn_b": bn_params(dim_inner),
        "wc": nrm((dim_out, dim_inner, 1, 1, 1)),
        "bn_c": bn_params(dim_out),
        "w1": nrm((dim_out, dim_in, 1, 1, 1)),
        "bn_1": bn_params(dim_out),
    }

    x = jax.random.normal(ks[next(ki)], (N, dim_in, T, H, W), dtype=jnp.float32)

    fwd = jax.jit(functools.partial(res_block_forward, temp_k=temp_k,
                                    stride=stride, dilation=dilation, eps=eps))
    out = fwd(x, params)
    jax.block_until_ready(out)

    ref = res_block_reference(x, params, temp_k=temp_k, stride=stride,
                              dilation=dilation, eps=eps)
    ref = jax.block_until_ready(ref)

    assert out.shape == (N, dim_out, T, H // stride, W // stride), out.shape
    # bf16 MXU operands (f32 accumulation) vs. an f32 reference -> loosened tol.
    max_err = float(jnp.max(jnp.abs(out - ref)))
    assert jnp.allclose(out, ref, atol=2e-2, rtol=2e-2), max_err

    print("KERNEL_OK")
</pallas_src>

<mosaic_0001>
module attributes {stable_mosaic.version = 11 : i64} {
  func.func @_res_block_kernel(%arg0: i32, %arg1: i32, %arg2: memref<1x1x64x4xbf16, #tpu.memory_space<vmem>>, %arg3: memref<1x1x64x4xbf16, #tpu.memory_space<vmem>>, %arg4: memref<1x1x64x4xbf16, #tpu.memory_space<vmem>>, %arg5: memref<3x4x8xbf16, #tpu.memory_space<vmem>>, %arg6: memref<1x8xf32, #tpu.memory_space<vmem>>, %arg7: memref<9x16x64xbf16, #tpu.memory_space<vmem>>, %arg8: memref<9x8x8xbf16, #tpu.memory_space<vmem>>, %arg9: memref<1x8xf32, #tpu.memory_space<vmem>>, %arg10: memref<8x16xbf16, #tpu.memory_space<vmem>>, %arg11: memref<16x64xbf16, #tpu.memory_space<vmem>>, %arg12: memref<4x16xbf16, #tpu.memory_space<vmem>>, %arg13: memref<1x16xf32, #tpu.memory_space<vmem>>, %arg14: memref<1x1x16x16xf32, #tpu.memory_space<vmem>>) attributes {dimension_semantics = [#tpu.dimension_semantics<parallel>, #tpu.dimension_semantics<parallel>], iteration_bounds = array<i64: 2, 4>, scalar_prefetch = 0 : i64, scratch_operands = 0 : i64, tpu.core_type = #tpu.core_type<tc>, window_params = [{transform_indices = @transform_0, window_bounds = array<i64: 1, 1, 64, 4>}, {transform_indices = @transform_1, window_bounds = array<i64: 1, 1, 64, 4>}, {transform_indices = @transform_2, window_bounds = array<i64: 1, 1, 64, 4>}, {pipeline_mode = #tpu.pipeline_mode<synchronous>, transform_indices = @transform_3, window_bounds = array<i64: 3, 4, 8>}, {pipeline_mode = #tpu.pipeline_mode<synchronous>, transform_indices = @transform_4, window_bounds = array<i64: 1, 8>}, {pipeline_mode = #tpu.pipeline_mode<synchronous>, transform_indices = @transform_5, window_bounds = array<i64: 9, 16, 64>}, {pipeline_mode = #tpu.pipeline_mode<synchronous>, transform_indices = @transform_6, window_bounds = array<i64: 9, 8, 8>}, {pipeline_mode = #tpu.pipeline_mode<synchronous>, transform_indices = @transform_7, window_bounds = array<i64: 1, 8>}, {pipeline_mode = #tpu.pipeline_mode<synchronous>, transform_indices = @transform_8, window_bounds = array<i64: 8, 16>}, {pipeline_mode = #tpu.pipeline_mode<synchronous>, transform_indices = @transform_9, window_bounds = array<i64: 16, 64>}, {pipeline_mode = #tpu.pipeline_mode<synchronous>, transform_indices = @transform_10, window_bounds = array<i64: 4, 16>}, {pipeline_mode = #tpu.pipeline_mode<synchronous>, transform_indices = @transform_11, window_bounds = array<i64: 1, 16>}, {transform_indices = @transform_12, window_bounds = array<i64: 1, 1, 16, 16>}]} {
    %cst = arith.constant 0.000000e+00 : f32
    %0 = vector.broadcast %cst : f32 to vector<64x8xf32>
    %c0 = arith.constant 0 : index
    %c0_0 = arith.constant 0 : index
    %c0_1 = arith.constant 0 : index
    %c0_2 = arith.constant 0 : index
    %1 = vector.load %arg2[%c0, %c0_0, %c0_1, %c0_2] : memref<1x1x64x4xbf16, #tpu.memory_space<vmem>>, vector<1x1x64x4xbf16>
    %2 = vector.shape_cast %1 : vector<1x1x64x4xbf16> to vector<64x4xbf16>
    %c0_3 = arith.constant 0 : index
    %c0_4 = arith.constant 0 : index
    %c0_5 = arith.constant 0 : index
    %3 = vector.load %arg5[%c0_3, %c0_4, %c0_5] : memref<3x4x8xbf16, #tpu.memory_space<vmem>>, vector<1x4x8xbf16>
    %4 = vector.shape_cast %3 : vector<1x4x8xbf16> to vector<4x8xbf16>
    %cst_6 = arith.constant dense<0.000000e+00> : vector<64x8xf32>
    %5 = tpu.matmul %2, %4, %cst_6 {dimension_numbers = #tpu.dot_dimension_numbers<[1], [0], [0], [1], [0, 0, 1, 1], [], []>} : vector<64x4xbf16>, vector<4x8xbf16>, vector<64x8xf32> -> vector<64x8xf32>
    %6 = arith.addf %0, %5 : vector<64x8xf32>
    %c0_7 = arith.constant 0 : index
    %c0_8 = arith.constant 0 : index
    %c0_9 = arith.constant 0 : index
    %c0_10 = arith.constant 0 : index
    %7 = vector.load %arg3[%c0_7, %c0_8, %c0_9, %c0_10] : memref<1x1x64x4xbf16, #tpu.memory_space<vmem>>, vector<1x1x64x4xbf16>
    %8 = vector.shape_cast %7 : vector<1x1x64x4xbf16> to vector<64x4xbf16>
    %c1 = arith.constant 1 : index
    %c0_11 = arith.constant 0 : index
    %c0_12 = arith.constant 0 : index
    %9 = vector.load %arg5[%c1, %c0_11, %c0_12] : memref<3x4x8xbf16, #tpu.memory_space<vmem>>, vector<1x4x8xbf16>
    %10 = vector.shape_cast %9 : vector<1x4x8xbf16> to vector<4x8xbf16>
    %cst_13 = arith.constant dense<0.000000e+00> : vector<64x8xf32>
    %11 = tpu.matmul %8, %10, %cst_13 {dimension_numbers = #tpu.dot_dimension_numbers<[1], [0], [0], [1], [0, 0, 1, 1], [], []>} : vector<64x4xbf16>, vector<4x8xbf16>, vector<64x8xf32> -> vector<64x8xf32>
    %12 = arith.addf %6, %11 : vector<64x8xf32>
    %c0_14 = arith.constant 0 : index
    %c0_15 = arith.constant 0 : index
    %c0_16 = arith.constant 0 : index
    %c0_17 = arith.constant 0 : index
    %13 = vector.load %arg4[%c0_14, %c0_15, %c0_16, %c0_17] : memref<1x1x64x4xbf16, #tpu.memory_space<vmem>>, vector<1x1x64x4xbf16>
    %14 = vector.shape_cast %13 : vector<1x1x64x4xbf16> to vector<64x4xbf16>
    %c2 = arith.constant 2 : index
    %c0_18 = arith.constant 0 : index
    %c0_19 = arith.constant 0 : index
    %15 = vector.load %arg5[%c2, %c0_18, %c0_19] : memref<3x4x8xbf16, #tpu.memory_space<vmem>>, vector<1x4x8xbf16>
    %16 = vector.shape_cast %15 : vector<1x4x8xbf16> to vector<4x8xbf16>
    %cst_20 = arith.constant dense<0.000000e+00> : vector<64x8xf32>
    %17 = tpu.matmul %14, %16, %cst_20 {dimension_numbers = #tpu.dot_dimension_numbers<[1], [0], [0], [1], [0, 0, 1, 1], [], []>} : vector<64x4xbf16>, vector<4x8xbf16>, vector<64x8xf32> -> vector<64x8xf32>
    %18 = arith.addf %12, %17 : vector<64x8xf32>
    %c0_21 = arith.constant 0 : index
    %c0_22 = arith.constant 0 : index
    %19 = vector.load %arg6[%c0_21, %c0_22] : memref<1x8xf32, #tpu.memory_space<vmem>>, vector<1x8xf32>
    %20 = vector.broadcast %19 : vector<1x8xf32> to vector<64x8xf32>
    %21 = arith.addf %18, %20 : vector<64x8xf32>
    %cst_23 = arith.constant 0.000000e+00 : f32
    %22 = vector.broadcast %cst_23 : f32 to vector<64x8xf32>
    %23 = arith.maximumf %21, %22 : vector<64x8xf32>
    %24 = arith.truncf %23 : vector<64x8xf32> to vector<64x8xbf16>
    %cst_24 = arith.constant 0.000000e+00 : f32
    %25 = vector.broadcast %cst_24 : f32 to vector<16x8xf32>
    %c0_25 = arith.constant 0 : index
    %c0_26 = arith.constant 0 : index
    %c0_27 = arith.constant 0 : index
    %26 = vector.load %arg7[%c0_25, %c0_26, %c0_27] : memref<9x16x64xbf16, #tpu.memory_space<vmem>>, vector<1x16x64xbf16>
    %27 = vector.shape_cast %26 : vector<1x16x64xbf16> to vector<16x64xbf16>
    %cst_28 = arith.constant dense<0.000000e+00> : vector<16x8xf32>
    %28 = tpu.matmul %27, %24, %cst_28 {dimension_numbers = #tpu.dot_dimension_numbers<[1], [0], [0], [1], [0, 0, 1, 1], [], []>} : vector<16x64xbf16>, vector<64x8xbf16>, vector<16x8xf32> -> vector<16x8xf32>
    %29 = arith.truncf %28 : vector<16x8xf32> to vector<16x8xbf16>
    %c0_29 = arith.constant 0 : index
    %c0_30 = arith.constant 0 : index
    %c0_31 = arith.constant 0 : index
    %30 = vector.load %arg8[%c0_29, %c0_30, %c0_31] : memref<9x8x8xbf16, #tpu.memory_space<vmem>>, vector<1x8x8xbf16>
    %31 = vector.shape_cast %30 : vector<1x8x8xbf16> to vector<8x8xbf16>
    %cst_32 = arith.constant dense<0.000000e+00> : vector<16x8xf32>
    %32 = tpu.matmul %29, %31, %cst_32 {dimension_numbers = #tpu.dot_dimension_numbers<[1], [0], [0], [1], [0, 0, 1, 1], [], []>} : vector<16x8xbf16>, vector<8x8xbf16>, vector<16x8xf32> -> vector<16x8xf32>
    %33 = arith.addf %25, %32 : vector<16x8xf32>
    %c1_33 = arith.constant 1 : index
    %c0_34 = arith.constant 0 : index
    %c0_35 = arith.constant 0 : index
    %34 = vector.load %arg7[%c1_33, %c0_34, %c0_35] : memref<9x16x64xbf16, #tpu.memory_space<vmem>>, vector<1x16x64xbf16>
    %35 = vector.shape_cast %34 : vector<1x16x64xbf16> to vector<16x64xbf16>
    %cst_36 = arith.constant dense<0.000000e+00> : vector<16x8xf32>
    %36 = tpu.matmul %35, %24, %cst_36 {dimension_numbers = #tpu.dot_dimension_numbers<[1], [0], [0], [1], [0, 0, 1, 1], [], []>} : vector<16x64xbf16>, vector<64x8xbf16>, vector<16x8xf32> -> vector<16x8xf32>
    %37 = arith.truncf %36 : vector<16x8xf32> to vector<16x8xbf16>
    %c1_37 = arith.constant 1 : index
    %c0_38 = arith.constant 0 : index
    %c0_39 = arith.constant 0 : index
    %38 = vector.load %arg8[%c1_37, %c0_38, %c0_39] : memref<9x8x8xbf16, #tpu.memory_space<vmem>>, vector<1x8x8xbf16>
    %39 = vector.shape_cast %38 : vector<1x8x8xbf16> to vector<8x8xbf16>
    %cst_40 = arith.constant dense<0.000000e+00> : vector<16x8xf32>
    %40 = tpu.matmul %37, %39, %cst_40 {dimension_numbers = #tpu.dot_dimension_numbers<[1], [0], [0], [1], [0, 0, 1, 1], [], []>} : vector<16x8xbf16>, vector<8x8xbf16>, vector<16x8xf32> -> vector<16x8xf32>
    %41 = arith.addf %33, %40 : vector<16x8xf32>
    %c2_41 = arith.constant 2 : index
    %c0_42 = arith.constant 0 : index
    %c0_43 = arith.constant 0 : index
    %42 = vector.load %arg7[%c2_41, %c0_42, %c0_43] : memref<9x16x64xbf16, #tpu.memory_space<vmem>>, vector<1x16x64xbf16>
    %43 = vector.shape_cast %42 : vector<1x16x64xbf16> to vector<16x64xbf16>
    %cst_44 = arith.constant dense<0.000000e+00> : vector<16x8xf32>
    %44 = tpu.matmul %43, %24, %cst_44 {dimension_numbers = #tpu.dot_dimension_numbers<[1], [0], [0], [1], [0, 0, 1, 1], [], []>} : vector<16x64xbf16>, vector<64x8xbf16>, vector<16x8xf32> -> vector<16x8xf32>
    %45 = arith.truncf %44 : vector<16x8xf32> to vector<16x8xbf16>
    %c2_45 = arith.constant 2 : index
    %c0_46 = arith.constant 0 : index
    %c0_47 = arith.constant 0 : index
    %46 = vector.load %arg8[%c2_45, %c0_46, %c0_47] : memref<9x8x8xbf16, #tpu.memory_space<vmem>>, vector<1x8x8xbf16>
    %47 = vector.shape_cast %46 : vector<1x8x8xbf16> to vector<8x8xbf16>
    %cst_48 = arith.constant dense<0.000000e+00> : vector<16x8xf32>
    %48 = tpu.matmul %45, %47, %cst_48 {dimension_numbers = #tpu.dot_dimension_numbers<[1], [0], [0], [1], [0, 0, 1, 1], [], []>} : vector<16x8xbf16>, vector<8x8xbf16>, vector<16x8xf32> -> vector<16x8xf32>
    %49 = arith.addf %41, %48 : vector<16x8xf32>
    %c3 = arith.constant 3 : index
    %c0_49 = arith.constant 0 : index
    %c0_50 = arith.constant 0 : index
    %50 = vector.load %arg7[%c3, %c0_49, %c0_50] : memref<9x16x64xbf16, #tpu.memory_space<vmem>>, vector<1x16x64xbf16>
    %51 = vector.shape_cast %50 : vector<1x16x64xbf16> to vector<16x64xbf16>
    %cst_51 = arith.constant dense<0.000000e+00> : vector<16x8xf32>
    %52 = tpu.matmul %51, %24, %cst_51 {dimension_numbers = #tpu.dot_dimension_numbers<[1], [0], [0], [1], [0, 0, 1, 1], [], []>} : vector<16x64xbf16>, vector<64x8xbf16>, vector<16x8xf32> -> vector<16x8xf32>
    %53 = arith.truncf %52 : vector<16x8xf32> to vector<16x8xbf16>
    %c3_52 = arith.constant 3 : index
    %c0_53 = arith.constant 0 : index
    %c0_54 = arith.constant 0 : index
    %54 = vector.load %arg8[%c3_52, %c0_53, %c0_54] : memref<9x8x8xbf16, #tpu.memory_space<vmem>>, vector<1x8x8xbf16>
    %55 = vector.shape_cast %54 : vector<1x8x8xbf16> to vector<8x8xbf16>
    %cst_55 = arith.constant dense<0.000000e+00> : vector<16x8xf32>
    %56 = tpu.matmul %53, %55, %cst_55 {dimension_numbers = #tpu.dot_dimension_numbers<[1], [0], [0], [1], [0, 0, 1, 1], [], []>} : vector<16x8xbf16>, vector<8x8xbf16>, vector<16x8xf32> -> vector<16x8xf32>
    %57 = arith.addf %49, %56 : vector<16x8xf32>
    %c4 = arith.constant 4 : index
    %c0_56 = arith.constant 0 : index
    %c0_57 = arith.constant 0 : index
    %58 = vector.load %arg7[%c4, %c0_56, %c0_57] : memref<9x16x64xbf16, #tpu.memory_space<vmem>>, vector<1x16x64xbf16>
    %59 = vector.shape_cast %58 : vector<1x16x64xbf16> to vector<16x64xbf16>
    %cst_58 = arith.constant dense<0.000000e+00> : vector<16x8xf32>
    %60 = tpu.matmul %59, %24, %cst_58 {dimension_numbers = #tpu.dot_dimension_numbers<[1], [0], [0], [1], [0, 0, 1, 1], [], []>} : vector<16x64xbf16>, vector<64x8xbf16>, vector<16x8xf32> -> vector<16x8xf32>
    %61 = arith.truncf %60 : vector<16x8xf32> to vector<16x8xbf16>
    %c4_59 = arith.constant 4 : index
    %c0_60 = arith.constant 0 : index
    %c0_61 = arith.constant 0 : index
    %62 = vector.load %arg8[%c4_59, %c0_60, %c0_61] : memref<9x8x8xbf16, #tpu.memory_space<vmem>>, vector<1x8x8xbf16>
    %63 = vector.shape_cast %62 : vector<1x8x8xbf16> to vector<8x8xbf16>
    %cst_62 = arith.constant dense<0.000000e+00> : vector<16x8xf32>
    %64 = tpu.matmul %61, %63, %cst_62 {dimension_numbers = #tpu.dot_dimension_numbers<[1], [0], [0], [1], [0, 0, 1, 1], [], []>} : vector<16x8xbf16>, vector<8x8xbf16>, vector<16x8xf32> -> vector<16x8xf32>
    %65 = arith.addf %57, %64 : vector<16x8xf32>
    %c5 = arith.constant 5 : index
    %c0_63 = arith.constant 0 : index
    %c0_64 = arith.constant 0 : index
    %66 = vector.load %arg7[%c5, %c0_63, %c0_64] : memref<9x16x64xbf16, #tpu.memory_space<vmem>>, vector<1x16x64xbf16>
    %67 = vector.shape_cast %66 : vector<1x16x64xbf16> to vector<16x64xbf16>
    %cst_65 = arith.constant dense<0.000000e+00> : vector<16x8xf32>
    %68 = tpu.matmul %67, %24, %cst_65 {dimension_numbers = #tpu.dot_dimension_numbers<[1], [0], [0], [1], [0, 0, 1, 1], [], []>} : vector<16x64xbf16>, vector<64x8xbf16>, vector<16x8xf32> -> vector<16x8xf32>
    %69 = arith.truncf %68 : vector<16x8xf32> to vector<16x8xbf16>
    %c5_66 = arith.constant 5 : index
    %c0_67 = arith.constant 0 : index
    %c0_68 = arith.constant 0 : index
    %70 = vector.load %arg8[%c5_66, %c0_67, %c0_68] : memref<9x8x8xbf16, #tpu.memory_space<vmem>>, vector<1x8x8xbf16>
    %71 = vector.shape_cast %70 : vector<1x8x8xbf16> to vector<8x8xbf16>
    %cst_69 = arith.constant dense<0.000000e+00> : vector<16x8xf32>
    %72 = tpu.matmul %69, %71, %cst_69 {dimension_numbers = #tpu.dot_dimension_numbers<[1], [0], [0], [1], [0, 0, 1, 1], [], []>} : vector<16x8xbf16>, vector<8x8xbf16>, vector<16x8xf32> -> vector<16x8xf32>
    %73 = arith.addf %65, %72 : vector<16x8xf32>
    %c6 = arith.constant 6 : index
    %c0_70 = arith.constant 0 : index
    %c0_71 = arith.constant 0 : index
    %74 = vector.load %arg7[%c6, %c0_70, %c0_71] : memref<9x16x64xbf16, #tpu.memory_space<vmem>>, vector<1x16x64xbf16>
    %75 = vector.shape_cast %74 : vector<1x16x64xbf16> to vector<16x64xbf16>
    %cst_72 = arith.constant dense<0.000000e+00> : vector<16x8xf32>
    %76 = tpu.matmul %75, %24, %cst_72 {dimension_numbers = #tpu.dot_dimension_numbers<[1], [0], [0], [1], [0, 0, 1, 1], [], []>} : vector<16x64xbf16>, vector<64x8xbf16>, vector<16x8xf32> -> vector<16x8xf32>
    %77 = arith.truncf %76 : vector<16x8xf32> to vector<16x8xbf16>
    %c6_73 = arith.constant 6 : index
    %c0_74 = arith.constant 0 : index
    %c0_75 = arith.constant 0 : index
    %78 = vector.load %arg8[%c6_73, %c0_74, %c0_75] : memref<9x8x8xbf16, #tpu.memory_space<vmem>>, vector<1x8x8xbf16>
    %79 = vector.shape_cast %78 : vector<1x8x8xbf16> to vector<8x8xbf16>
    %cst_76 = arith.constant dense<0.000000e+00> : vector<16x8xf32>
    %80 = tpu.matmul %77, %79, %cst_76 {dimension_numbers = #tpu.dot_dimension_numbers<[1], [0], [0], [1], [0, 0, 1, 1], [], []>} : vector<16x8xbf16>, vector<8x8xbf16>, vector<16x8xf32> -> vector<16x8xf32>
    %81 = arith.addf %73, %80 : vector<16x8xf32>
    %c7 = arith.constant 7 : index
    %c0_77 = arith.constant 0 : index
    %c0_78 = arith.constant 0 : index
    %82 = vector.load %arg7[%c7, %c0_77, %c0_78] : memref<9x16x64xbf16, #tpu.memory_space<vmem>>, vector<1x16x64xbf16>
    %83 = vector.shape_cast %82 : vector<1x16x64xbf16> to vector<16x64xbf16>
    %cst_79 = arith.constant dense<0.000000e+00> : vector<16x8xf32>
    %84 = tpu.matmul %83, %24, %cst_79 {dimension_numbers = #tpu.dot_dimension_numbers<[1], [0], [0], [1], [0, 0, 1, 1], [], []>} : vector<16x64xbf16>, vector<64x8xbf16>, vector<16x8xf32> -> vector<16x8xf32>
    %85 = arith.truncf %84 : vector<16x8xf32> to vector<16x8xbf16>
    %c7_80 = arith.constant 7 : index
    %c0_81 = arith.constant 0 : index
    %c0_82 = arith.constant 0 : index
    %86 = vector.load %arg8[%c7_80, %c0_81, %c0_82] : memref<9x8x8xbf16, #tpu.memory_space<vmem>>, vector<1x8x8xbf16>
    %87 = vector.shape_cast %86 : vector<1x8x8xbf16> to vector<8x8xbf16>
    %cst_83 = arith.constant dense<0.000000e+00> : vector<16x8xf32>
    %88 = tpu.matmul %85, %87, %cst_83 {dimension_numbers = #tpu.dot_dimension_numbers<[1], [0], [0], [1], [0, 0, 1, 1], [], []>} : vector<16x8xbf16>, vector<8x8xbf16>, vector<16x8xf32> -> vector<16x8xf32>
    %89 = arith.addf %81, %88 : vector<16x8xf32>
    %c8 = arith.constant 8 : index
    %c0_84 = arith.constant 0 : index
    %c0_85 = arith.constant 0 : index
    %90 = vector.load %arg7[%c8, %c0_84, %c0_85] : memref<9x16x64xbf16, #tpu.memory_space<vmem>>, vector<1x16x64xbf16>
    %91 = vector.shape_cast %90 : vector<1x16x64xbf16> to vector<16x64xbf16>
    %cst_86 = arith.constant dense<0.000000e+00> : vector<16x8xf32>
    %92 = tpu.matmul %91, %24, %cst_86 {dimension_numbers = #tpu.dot_dimension_numbers<[1], [0], [0], [1], [0, 0, 1, 1], [], []>} : vector<16x64xbf16>, vector<64x8xbf16>, vector<16x8xf32> -> vector<16x8xf32>
    %93 = arith.truncf %92 : vector<16x8xf32> to vector<16x8xbf16>
    %c8_87 = arith.constant 8 : index
    %c0_88 = arith.constant 0 : index
    %c0_89 = arith.constant 0 : index
    %94 = vector.load %arg8[%c8_87, %c0_88, %c0_89] : memref<9x8x8xbf16, #tpu.memory_space<vmem>>, vector<1x8x8xbf16>
    %95 = vector.shape_cast %94 : vector<1x8x8xbf16> to vector<8x8xbf16>
    %cst_90 = arith.constant dense<0.000000e+00> : vector<16x8xf32>
    %96 = tpu.matmul %93, %95, %cst_90 {dimension_numbers = #tpu.dot_dimension_numbers<[1], [0], [0], [1], [0, 0, 1, 1], [], []>} : vector<16x8xbf16>, vector<8x8xbf16>, vector<16x8xf32> -> vector<16x8xf32>
    %97 = arith.addf %89, %96 : vector<16x8xf32>
    %c0_91 = arith.constant 0 : index
    %c0_92 = arith.constant 0 : index
    %98 = vector.load %arg9[%c0_91, %c0_92] : memref<1x8xf32, #tpu.memory_space<vmem>>, vector<1x8xf32>
    %99 = vector.broadcast %98 : vector<1x8xf32> to vector<16x8xf32>
    %100 = arith.addf %97, %99 : vector<16x8xf32>
    %cst_93 = arith.constant 0.000000e+00 : f32
    %101 = vector.broadcast %cst_93 : f32 to vector<16x8xf32>
    %102 = arith.maximumf %100, %101 : vector<16x8xf32>
    %103 = arith.truncf %102 : vector<16x8xf32> to vector<16x8xbf16>
    %c0_94 = arith.constant 0 : index
    %c0_95 = arith.constant 0 : index
    %104 = vector.load %arg10[%c0_94, %c0_95] : memref<8x16xbf16, #tpu.memory_space<vmem>>, vector<8x16xbf16>
    %cst_96 = arith.constant dense<0.000000e+00> : vector<16x16xf32>
    %105 = tpu.matmul %103, %104, %cst_96 {dimension_numbers = #tpu.dot_dimension_numbers<[1], [0], [0], [1], [0, 0, 1, 1], [], []>} : vector<16x8xbf16>, vector<8x16xbf16>, vector<16x16xf32> -> vector<16x16xf32>
    %c0_97 = arith.constant 0 : index
    %c0_98 = arith.constant 0 : index
    %c0_99 = arith.constant 0 : index
    %c0_100 = arith.constant 0 : index
    %106 = vector.load %arg3[%c0_97, %c0_98, %c0_99, %c0_100] : memref<1x1x64x4xbf16, #tpu.memory_space<vmem>>, vector<1x1x64x4xbf16>
    %107 = vector.shape_cast %106 : vector<1x1x64x4xbf16> to vector<64x4xbf16>
    %c0_101 = arith.constant 0 : index
    %c0_102 = arith.constant 0 : index
    %108 = vector.load %arg11[%c0_101, %c0_102] : memref<16x64xbf16, #tpu.memory_space<vmem>>, vector<16x64xbf16>
    %cst_103 = arith.constant dense<0.000000e+00> : vector<16x4xf32>
    %109 = tpu.matmul %108, %107, %cst_103 {dimension_numbers = #tpu.dot_dimension_numbers<[1], [0], [0], [1], [0, 0, 1, 1], [], []>} : vector<16x64xbf16>, vector<64x4xbf16>, vector<16x4xf32> -> vector<16x4xf32>
    %110 = arith.truncf %109 : vector<16x4xf32> to vector<16x4xbf16>
    %c0_104 = arith.constant 0 : index
    %c0_105 = arith.constant 0 : index
    %111 = vector.load %arg12[%c0_104, %c0_105] : memref<4x16xbf16, #tpu.memory_space<vmem>>, vector<4x16xbf16>
    %cst_106 = arith.constant dense<0.000000e+00> : vector<16x16xf32>
    %112 = tpu.matmul %110, %111, %cst_106 {dimension_numbers = #tpu.dot_dimension_numbers<[1], [0], [0], [1], [0, 0, 1, 1], [], []>} : vector<16x4xbf16>, vector<4x16xbf16>, vector<16x16xf32> -> vector<16x16xf32>
    %113 = arith.addf %105, %112 : vector<16x16xf32>
    %c0_107 = arith.constant 0 : index
    %c0_108 = arith.constant 0 : index
    %114 = vector.load %arg13[%c0_107, %c0_108] : memref<1x16xf32, #tpu.memory_space<vmem>>, vector<1x16xf32>
    %115 = vector.broadcast %114 : vector<1x16xf32> to vector<16x16xf32>
    %116 = arith.addf %113, %115 : vector<16x16xf32>
    %cst_109 = arith.constant 0.000000e+00 : f32
    %117 = vector.broadcast %cst_109 : f32 to vector<16x16xf32>
    %118 = arith.maximumf %116, %117 : vector<16x16xf32>
    %c0_110 = arith.constant 0 : index
    %c0_111 = arith.constant 0 : index
    %c0_112 = arith.constant 0 : index
    %c0_113 = arith.constant 0 : index
    %119 = vector.load %arg14[%c0_110, %c0_111, %c0_112, %c0_113] : memref<1x1x16x16xf32, #tpu.memory_space<vmem>>, vector<1x1x16x16xf32>
    %120 = vector.shape_cast %119 : vector<1x1x16x16xf32> to vector<16x16xf32>
    %121 = vector.shape_cast %118 : vector<16x16xf32> to vector<1x1x16x16xf32>
    tpu.vector_store %arg14[%c0_110, %c0_111, %c0_112, %c0_113], %121 {strides = array<i32>} : memref<1x1x16x16xf32, #tpu.memory_space<vmem>>, vector<1x1x16x16xf32>,
    return
  }
  func.func @transform_0(%arg0: i32, %arg1: i32) -> (i32, i32, i32, i32) {
    %c0_i32 = arith.constant 0 : i32
    %0 = arith.addi %arg1, %c0_i32 : i32
    %c0_i32_0 = arith.constant 0 : i32
    %c0_i32_1 = arith.constant 0 : i32
    %c0_i32_2 = arith.constant 0 : i32
    return %arg0, %0, %c0_i32_0, %c0_i32_1 : i32, i32, i32, i32
  }
  func.func @transform_1(%arg0: i32, %arg1: i32) -> (i32, i32, i32, i32) {
    %c1_i32 = arith.constant 1 : i32
    %0 = arith.addi %arg1, %c1_i32 : i32
    %c0_i32 = arith.constant 0 : i32
    %c0_i32_0 = arith.constant 0 : i32
    %c0_i32_1 = arith.constant 0 : i32
    return %arg0, %0, %c0_i32, %c0_i32_0 : i32, i32, i32, i32
  }
  func.func @transform_2(%arg0: i32, %arg1: i32) -> (i32, i32, i32, i32) {
    %c2_i32 = arith.constant 2 : i32
    %0 = arith.addi %arg1, %c2_i32 : i32
    %c0_i32 = arith.constant 0 : i32
    %c0_i32_0 = arith.constant 0 : i32
    %c0_i32_1 = arith.constant 0 : i32
    return %arg0, %0, %c0_i32, %c0_i32_0 : i32, i32, i32, i32
  }
  func.func @transform_3(%arg0: i32, %arg1: i32) -> (i32, i32, i32) {
    %c0_i32 = arith.constant 0 : i32
    %c0_i32_0 = arith.constant 0 : i32
    %c0_i32_1 = arith.constant 0 : i32
    %c0_i32_2 = arith.constant 0 : i32
    return %c0_i32, %c0_i32_0, %c0_i32_1 : i32, i32, i32
  }
  func.func @transform_4(%arg0: i32, %arg1: i32) -> (i32, i32) {
    %c0_i32 = arith.constant 0 : i32
    %c0_i32_0 = arith.constant 0 : i32
    %c0_i32_1 = arith.constant 0 : i32
    return %c0_i32, %c0_i32_0 : i32, i32
  }
  func.func @transform_5(%arg0: i32, %arg1: i32) -> (i32, i32, i32) {
    %c0_i32 = arith.constant 0 : i32
    %c0_i32_0 = arith.constant 0 : i32
    %c0_i32_1 = arith.constant 0 : i32
    %c0_i32_2 = arith.constant 0 : i32
    return %c0_i32, %c0_i32_0, %c0_i32_1 : i32, i32, i32
  }
  func.func @transform_6(%arg0: i32, %arg1: i32) -> (i32, i32, i32) {
    %c0_i32 = arith.constant 0 : i32
    %c0_i32_0 = arith.constant 0 : i32
    %c0_i32_1 = arith.constant 0 : i32
    %c0_i32_2 = arith.constant 0 : i32
    return %c0_i32, %c0_i32_0, %c0_i32_1 : i32, i32, i32
  }
  func.func @transform_7(%arg0: i32, %arg1: i32) -> (i32, i32) {
    %c0_i32 = arith.constant 0 : i32
    %c0_i32_0 = arith.constant 0 : i32
    %c0_i32_1 = arith.constant 0 : i32
    return %c0_i32, %c0_i32_0 : i32, i32
  }
  func.func @transform_8(%arg0: i32, %arg1: i32) -> (i32, i32) {
    %c0_i32 = arith.constant 0 : i32
    %c0_i32_0 = arith.constant 0 : i32
    %c0_i32_1 = arith.constant 0 : i32
    return %c0_i32, %c0_i32_0 : i32, i32
  }
  func.func @transform_9(%arg0: i32, %arg1: i32) -> (i32, i32) {
    %c0_i32 = arith.constant 0 : i32
    %c0_i32_0 = arith.constant 0 : i32
    %c0_i32_1 = arith.constant 0 : i32
    return %c0_i32, %c0_i32_0 : i32, i32
  }
  func.func @transform_10(%arg0: i32, %arg1: i32) -> (i32, i32) {
    %c0_i32 = arith.constant 0 : i32
    %c0_i32_0 = arith.constant 0 : i32
    %c0_i32_1 = arith.constant 0 : i32
    return %c0_i32, %c0_i32_0 : i32, i32
  }
  func.func @transform_11(%arg0: i32, %arg1: i32) -> (i32, i32) {
    %c0_i32 = arith.constant 0 : i32
    %c0_i32_0 = arith.constant 0 : i32
    %c0_i32_1 = arith.constant 0 : i32
    return %c0_i32, %c0_i32_0 : i32, i32
  }
  func.func @transform_12(%arg0: i32, %arg1: i32) -> (i32, i32, i32, i32) {
    %c0_i32 = arith.constant 0 : i32
    %c0_i32_0 = arith.constant 0 : i32
    %c0_i32_1 = arith.constant 0 : i32
    return %arg0, %arg1, %c0_i32, %c0_i32_0 : i32, i32, i32, i32
  }
}

</mosaic_0001>

<llo_original>
// kernel: res_block_forward.1
$region0: #{res_block_forward.1}
  #allocation0 [shape = 'u32[]', space=smem, size = 0x4, offset = 0x4, fixed_abs, tag = 'smem constant byte address 0x4 - core index']
  #allocation1 [shape = 'u32[144,128]{1,0:T(1,128)}', space=vmem, size = 0x12000, scoped, tag = 'internal scratch']
  %s0 = inlined_call_operand.vmem [shape: bf16[2,6,64,4], index: 0, kind: input, shape index: {}, may-alias: {0,1,2}]
  %s1 = inlined_call_operand.vmem [shape: bf16[2,6,64,4], index: 1, kind: input, shape index: {}, may-alias: {0,1,2}]
  %s2 = inlined_call_operand.vmem [shape: bf16[2,6,64,4], index: 2, kind: input, shape index: {}, may-alias: {0,1,2}]
  %s3 = inlined_call_operand.vmem [shape: bf16[3,4,8], index: 3, kind: input, shape index: {}]
  %s4 = inlined_call_operand.vmem [shape: f32[1,8], index: 4, kind: input, shape index: {}]
  %s5 = inlined_call_operand.vmem [shape: bf16[9,16,64], index: 5, kind: input, shape index: {}]
  %s6 = inlined_call_operand.vmem [shape: bf16[9,8,8], index: 6, kind: input, shape index: {}]
  %s7 = inlined_call_operand.vmem [shape: f32[1,8], index: 7, kind: input, shape index: {}]
  %s8 = inlined_call_operand.vmem [shape: bf16[8,16], index: 8, kind: input, shape index: {}]
  %s9 = inlined_call_operand.vmem [shape: bf16[16,64], index: 9, kind: input, shape index: {}]
  %s10 = inlined_call_operand.vmem [shape: bf16[4,16], index: 10, kind: input, shape index: {}]
  %s11 = inlined_call_operand.vmem [shape: f32[1,16], index: 11, kind: input, shape index: {}]
  %s12 = inlined_call_operand.hbm [shape: f32[2,4,16,16], index: 12, kind: output, shape index: {}]
  %s13 = sld [smem:[#allocation0]]
  $region81: #{res_block_forward.1} parent=0
    _
  %s15 = ssub.s32 1, %s13
  %s16 = scalar_select 0, %s15, %s13
  $region1: #{res_block_forward.1} parent=0
    #allocation2 [shape = 'u8[16384]{0}', space=vmem, size = 0x4000, scoped, tag = 'output window, operand 0']
    #allocation3 [shape = 's32[2]{0}', space=sflag, size = 0x8, scoped, tag = 'scoped memory for res_block_forward.1']
    %17 = vsyncpa [#allocation3], 0
    %s18 = scalar_lea.sflag [#allocation3], 1
    %19 = vsyncpa %s18, 0
    loop: start=0, step=1, limit=10
    $region2: #{res_block_forward.1} parent=1 // loop_pre_header
      _
    $region3: #{res_block_forward.1} parent=1 // loop_header
      %s21 = sphi 0, %s25
      %p22 = scmp.ge.s32.totalorder %s21, 10
      %s28 = sphi 0, %s40
      %s29 = sphi 0, %s36
      %s30 = sphi 0, %s28
      %s31 = sphi 0, %s29
      %s32 = sphi 0, %s30
      %s33 = sphi 0, %s31
      %s45 = sphi 0, %s47
      %s48 = sphi 0, %s45
      %s49 = sphi 0, %s48
      %s65 = sphi 0, %s49
      %s75 = sphi 0, %s77
      %s78 = sphi 0, %s75
      %s79 = sphi 0, %s78
      %s95 = sphi 0, %s79
      %s105 = sphi 0, %s107
      %s108 = sphi 0, %s105
      %s109 = sphi 0, %s108
      %s125 = sphi 0, %s109
      %s129 = sphi 0, %s129
      %s131 = sphi 0, %s129
      %s132 = sphi 0, %s131
      %s146 = sphi 0, %s132
      %s150 = sphi 0, %s150
      %s152 = sphi 0, %s150
      %s153 = sphi 0, %s152
      %s167 = sphi 0, %s153
      %s171 = sphi 0, %s171
      %s173 = sphi 0, %s171
      %s174 = sphi 0, %s173
      %s188 = sphi 0, %s174
      %s192 = sphi 0, %s192
      %s194 = sphi 0, %s192
      %s195 = sphi 0, %s194
      %s209 = sphi 0, %s195
      %s213 = sphi 0, %s213
      %s215 = sphi 0, %s213
      %s216 = sphi 0, %s215
      %s230 = sphi 0, %s216
      %s234 = sphi 0, %s234
      %s236 = sphi 0, %s234
      %s237 = sphi 0, %s236
      %s251 = sphi 0, %s237
      %s255 = sphi 0, %s255
      %s257 = sphi 0, %s255
      %s258 = sphi 0, %s257
      %s272 = sphi 0, %s258
      %s276 = sphi 0, %s276
      %s278 = sphi 0, %s276
      %s279 = sphi 0, %s278
      %s293 = sphi 0, %s279
      %s297 = sphi 0, %s297
      %s299 = sphi 0, %s297
      %s300 = sphi 0, %s299
      %s314 = sphi 0, %s300
      %s322 = sphi 0, %s324
      %s325 = sphi 0, %s322
      %s326 = sphi 0, %s325
      %s342 = sphi 0, %s326
    $region4: #{res_block_forward.1} parent=1 // loop_header_branch
      %24 = sbr.rel (%p22) target = $region8
    $region5: #{res_block_forward.1} parent=1 // loop_body
      %s26 = ssub.s32 %s21, 1
      %s27 = ssub.s32 %s21, 2
      %s34 = sadd.s32 1, %s29
      %p35 = scmp.ge.s32.totalorder %s34, 4
      %s36 = scalar_select %p35, 0, %s34
      %s37 = sadd.s32 1, %s28
      %s38 = scalar_select %p35, %s37, %s28
      %p39 = scmp.ge.s32.totalorder %s38, 2
      %s40 = scalar_select %p39, 0, %s38
      %s41 = ssub.s32 %s28, %s40
      %s42 = ssub.s32 %s29, %s36
      %s43 = sor.u32 %s41, %s42
      %p44 = scmp.eq.s32.totalorder %s43, 0
      %s46 = sadd.s32 %s45, 1
      %s47 = scalar_select %p44, %s45, %s46
      %p50 = pneg %p44
      %p51 = scmp.eq.s32.totalorder %s21, 7
      %p52 = por %p50, %p51
      %p53 = scmp.ne.s32.totalorder %s45, %s48
      %p54 = scmp.eq.s32.totalorder %s21, 0
      %p55 = por %p53, %p54
      %p56 = scmp.ne.s32.totalorder %s45, %s48
      %p57 = scmp.eq.s32.totalorder %s26, 7
      %p58 = por %p56, %p57
      %p59 = scmp.ne.s32.totalorder %s48, %s49
      %p60 = scmp.eq.s32.totalorder %s26, 0
      %p61 = por %p59, %p60
      %p62 = scmp.ne.s32.totalorder %s48, %s49
      %p63 = scmp.eq.s32.totalorder %s27, 7
      %p64 = por %p62, %p63
      %p66 = scmp.ne.s32.totalorder %s49, %s65
      %p67 = scmp.eq.s32.totalorder %s27, 0
      %p68 = por %p66, %p67
      %s69 = sadd.s32 %s29, 1
      %s70 = sadd.s32 %s36, 1
      %s71 = ssub.s32 %s28, %s40
      %s72 = ssub.s32 %s69, %s70
      %s73 = sor.u32 %s71, %s72
      %p74 = scmp.eq.s32.totalorder %s73, 0
      %s76 = sadd.s32 %s75, 1
      %s77 = scalar_select %p74, %s75, %s76
      %p80 = pneg %p74
      %p81 = scmp.eq.s32.totalorder %s21, 7
      %p82 = por %p80, %p81
      %p83 = scmp.ne.s32.totalorder %s75, %s78
      %p84 = scmp.eq.s32.totalorder %s21, 0
      %p85 = por %p83, %p84
      %p86 = scmp.ne.s32.totalorder %s75, %s78
      %p87 = scmp.eq.s32.totalorder %s26, 7
      %p88 = por %p86, %p87
      %p89 = scmp.ne.s32.totalorder %s78, %s79
      %p90 = scmp.eq.s32.totalorder %s26, 0
      %p91 = por %p89, %p90
      %p92 = scmp.ne.s32.totalorder %s78, %s79
      %p93 = scmp.eq.s32.totalorder %s27, 7
      %p94 = por %p92, %p93
      %p96 = scmp.ne.s32.totalorder %s79, %s95
      %p97 = scmp.eq.s32.totalorder %s27, 0
      %p98 = por %p96, %p97
      %s99 = sadd.s32 %s29, 2
      %s100 = sadd.s32 %s36, 2
      %s101 = ssub.s32 %s28, %s40
      %s102 = ssub.s32 %s99, %s100
      %s103 = sor.u32 %s101, %s102
      %p104 = scmp.eq.s32.totalorder %s103, 0
      %s106 = sadd.s32 %s105, 1
      %s107 = scalar_select %p104, %s105, %s106
      %p110 = pneg %p104
      %p111 = scmp.eq.s32.totalorder %s21, 7
      %p112 = por %p110, %p111
      %p113 = scmp.ne.s32.totalorder %s105, %s108
      %p114 = scmp.eq.s32.totalorder %s21, 0
      %p115 = por %p113, %p114
      %p116 = scmp.ne.s32.totalorder %s105, %s108
      %p117 = scmp.eq.s32.totalorder %s26, 7
      %p118 = por %p116, %p117
      %p119 = scmp.ne.s32.totalorder %s108, %s109
      %p120 = scmp.eq.s32.totalorder %s26, 0
      %p121 = por %p119, %p120
      %p122 = scmp.ne.s32.totalorder %s108, %s109
      %p123 = scmp.eq.s32.totalorder %s27, 7
      %p124 = por %p122, %p123
      %p126 = scmp.ne.s32.totalorder %s109, %s125
      %p127 = scmp.eq.s32.totalorder %s27, 0
      %p128 = por %p126, %p127
      %s130 = sadd.s32 %s129, 1
      %p133 = scmp.eq.s32.totalorder %s21, 7
      %p134 = scmp.ne.s32.totalorder %s129, %s131
      %p135 = scmp.eq.s32.totalorder %s21, 0
      %p136 = por %p134, %p135
      %p137 = scmp.ne.s32.totalorder %s129, %s131
      %p138 = scmp.eq.s32.totalorder %s26, 7
      %p139 = por %p137, %p138
      %p140 = scmp.ne.s32.totalorder %s131, %s132
      %p141 = scmp.eq.s32.totalorder %s26, 0
      %p142 = por %p140, %p141
      %p143 = scmp.ne.s32.totalorder %s131, %s132
      %p144 = scmp.eq.s32.totalorder %s27, 7
      %p145 = por %p143, %p144
      %p147 = scmp.ne.s32.totalorder %s132, %s146
      %p148 = scmp.eq.s32.totalorder %s27, 0
      %p149 = por %p147, %p148
      %s151 = sadd.s32 %s150, 1
      %p154 = scmp.eq.s32.totalorder %s21, 7
      %p155 = scmp.ne.s32.totalorder %s150, %s152
      %p156 = scmp.eq.s32.totalorder %s21, 0
      %p157 = por %p155, %p156
      %p158 = scmp.ne.s32.totalorder %s150, %s152
      %p159 = scmp.eq.s32.totalorder %s26, 7
      %p160 = por %p158, %p159
      %p161 = scmp.ne.s32.totalorder %s152, %s153
      %p162 = scmp.eq.s32.totalorder %s26, 0
      %p163 = por %p161, %p162
      %p164 = scmp.ne.s32.totalorder %s152, %s153
      %p165 = scmp.eq.s32.totalorder %s27, 7
      %p166 = por %p164, %p165
      %p168 = scmp.ne.s32.totalorder %s153, %s167
      %p169 = scmp.eq.s32.totalorder %s27, 0
      %p170 = por %p168, %p169
      %s172 = sadd.s32 %s171, 1
      %p175 = scmp.eq.s32.totalorder %s21, 7
      %p176 = scmp.ne.s32.totalorder %s171, %s173
      %p177 = scmp.eq.s32.totalorder %s21, 0
      %p178 = por %p176, %p177
      %p179 = scmp.ne.s32.totalorder %s171, %s173
      %p180 = scmp.eq.s32.totalorder %s26, 7
      %p181 = por %p179, %p180
      %p182 = scmp.ne.s32.totalorder %s173, %s174
      %p183 = scmp.eq.s32.totalorder %s26, 0
      %p184 = por %p182, %p183
      %p185 = scmp.ne.s32.totalorder %s173, %s174
      %p186 = scmp.eq.s32.totalorder %s27, 7
      %p187 = por %p185, %p186
      %p189 = scmp.ne.s32.totalorder %s174, %s188
      %p190 = scmp.eq.s32.totalorder %s27, 0
      %p191 = por %p189, %p190
      %s193 = sadd.s32 %s192, 1
      %p196 = scmp.eq.s32.totalorder %s21, 7
      %p197 = scmp.ne.s32.totalorder %s192, %s194
      %p198 = scmp.eq.s32.totalorder %s21, 0
      %p199 = por %p197, %p198
      %p200 = scmp.ne.s32.totalorder %s192, %s194
      %p201 = scmp.eq.s32.totalorder %s26, 7
      %p202 = por %p200, %p201
      %p203 = scmp.ne.s32.totalorder %s194, %s195
      %p204 = scmp.eq.s32.totalorder %s26, 0
      %p205 = por %p203, %p204
      %p206 = scmp.ne.s32.totalorder %s194, %s195
      %p207 = scmp.eq.s32.totalorder %s27, 7
      %p208 = por %p206, %p207
      %p210 = scmp.ne.s32.totalorder %s195, %s209
      %p211 = scmp.eq.s32.totalorder %s27, 0
      %p212 = por %p210, %p211
      %s214 = sadd.s32 %s213, 1
      %p217 = scmp.eq.s32.totalorder %s21, 7
      %p218 = scmp.ne.s32.totalorder %s213, %s215
      %p219 = scmp.eq.s32.totalorder %s21, 0
      %p220 = por %p218, %p219
      %p221 = scmp.ne.s32.totalorder %s213, %s215
      %p222 = scmp.eq.s32.totalorder %s26, 7
      %p223 = por %p221, %p222
      %p224 = scmp.ne.s32.totalorder %s215, %s216
      %p225 = scmp.eq.s32.totalorder %s26, 0
      %p226 = por %p224, %p225
      %p227 = scmp.ne.s32.totalorder %s215, %s216
      %p228 = scmp.eq.s32.totalorder %s27, 7
      %p229 = por %p227, %p228
      %p231 = scmp.ne.s32.totalorder %s216, %s230
      %p232 = scmp.eq.s32.totalorder %s27, 0
      %p233 = por %p231, %p232
      %s235 = sadd.s32 %s234, 1
      %p238 = scmp.eq.s32.totalorder %s21, 7
      %p239 = scmp.ne.s32.totalorder %s234, %s236
      %p240 = scmp.eq.s32.totalorder %s21, 0
      %p241 = por %p239, %p240
      %p242 = scmp.ne.s32.totalorder %s234, %s236
      %p243 = scmp.eq.s32.totalorder %s26, 7
      %p244 = por %p242, %p243
      %p245 = scmp.ne.s32.totalorder %s236, %s237
      %p246 = scmp.eq.s32.totalorder %s26, 0
      %p247 = por %p245, %p246
      %p248 = scmp.ne.s32.totalorder %s236, %s237
      %p249 = scmp.eq.s32.totalorder %s27, 7
      %p250 = por %p248, %p249
      %p252 = scmp.ne.s32.totalorder %s237, %s251
      %p253 = scmp.eq.s32.totalorder %s27, 0
      %p254 = por %p252, %p253
      %s256 = sadd.s32 %s255, 1
      %p259 = scmp.eq.s32.totalorder %s21, 7
      %p260 = scmp.ne.s32.totalorder %s255, %s257
      %p261 = scmp.eq.s32.totalorder %s21, 0
      %p262 = por %p260, %p261
      %p263 = scmp.ne.s32.totalorder %s255, %s257
      %p264 = scmp.eq.s32.totalorder %s26, 7
      %p265 = por %p263, %p264
      %p266 = scmp.ne.s32.totalorder %s257, %s258
      %p267 = scmp.eq.s32.totalorder %s26, 0
      %p268 = por %p266, %p267
      %p269 = scmp.ne.s32.totalorder %s257, %s258
      %p270 = scmp.eq.s32.totalorder %s27, 7
      %p271 = por %p269, %p270
      %p273 = scmp.ne.s32.totalorder %s258, %s272
      %p274 = scmp.eq.s32.totalorder %s27, 0
      %p275 = por %p273, %p274
      %s277 = sadd.s32 %s276, 1
      %p280 = scmp.eq.s32.totalorder %s21, 7
      %p281 = scmp.ne.s32.totalorder %s276, %s278
      %p282 = scmp.eq.s32.totalorder %s21, 0
      %p283 = por %p281, %p282
      %p284 = scmp.ne.s32.totalorder %s276, %s278
      %p285 = scmp.eq.s32.totalorder %s26, 7
      %p286 = por %p284, %p285
      %p287 = scmp.ne.s32.totalorder %s278, %s279
      %p288 = scmp.eq.s32.totalorder %s26, 0
      %p289 = por %p287, %p288
      %p290 = scmp.ne.s32.totalorder %s278, %s279
      %p291 = scmp.eq.s32.totalorder %s27, 7
      %p292 = por %p290, %p291
      %p294 = scmp.ne.s32.totalorder %s279, %s293
      %p295 = scmp.eq.s32.totalorder %s27, 0
      %p296 = por %p294, %p295
      %s298 = sadd.s32 %s297, 1
      %p301 = scmp.eq.s32.totalorder %s21, 7
      %p302 = scmp.ne.s32.totalorder %s297, %s299
      %p303 = scmp.eq.s32.totalorder %s21, 0
      %p304 = por %p302, %p303
      %p305 = scmp.ne.s32.totalorder %s297, %s299
      %p306 = scmp.eq.s32.totalorder %s26, 7
      %p307 = por %p305, %p306
      %p308 = scmp.ne.s32.totalorder %s299, %s300
      %p309 = scmp.eq.s32.totalorder %s26, 0
      %p310 = por %p308, %p309
      %p311 = scmp.ne.s32.totalorder %s299, %s300
      %p312 = scmp.eq.s32.totalorder %s27, 7
      %p313 = por %p311, %p312
      %p315 = scmp.ne.s32.totalorder %s300, %s314
      %p316 = scmp.eq.s32.totalorder %s27, 0
      %p317 = por %p315, %p316
      %s318 = ssub.s32 %s28, %s40
      %s319 = ssub.s32 %s29, %s36
      %s320 = sor.u32 %s318, %s319
      %p321 = scmp.eq.s32.totalorder %s320, 0
      %s323 = sadd.s32 %s322, 1
      %s324 = scalar_select %p321, %s322, %s323
      %p327 = pneg %p321
      %p328 = scmp.eq.s32.totalorder %s21, 7
      %p329 = por %p327, %p328
      %p330 = scmp.ne.s32.totalorder %s322, %s325
      %p331 = scmp.eq.s32.totalorder %s21, 0
      %p332 = por %p330, %p331
      %p333 = scmp.ne.s32.totalorder %s322, %s325
      %p334 = scmp.eq.s32.totalorder %s26, 7
      %p335 = por %p333, %p334
      %p336 = scmp.ne.s32.totalorder %s325, %s326
      %p337 = scmp.eq.s32.totalorder %s26, 0
      %p338 = por %p336, %p337
      %p339 = scmp.ne.s32.totalorder %s325, %s326
      %p340 = scmp.eq.s32.totalorder %s27, 7
      %p341 = por %p339, %p340
      %p343 = scmp.ne.s32.totalorder %s326, %s342
      %p344 = scmp.eq.s32.totalorder %s27, 0
      %p345 = por %p343, %p344
      %p346 = scmp.le.s32.totalorder 1, %s21
      %p347 = scmp.lt.s32.totalorder %s21, 9
      %p348 = pnand %p346, %p347
      %p349 = pneg %p348
      // Predicated region
      $region9: #{res_block_forward.1} parent=5 // pred_check
        _
      $region10: #{res_block_forward.1} parent=5 // pred_check_branch
        %351 = sbr.rel (%p348) target = $region12
      $region11: #{res_block_forward.1} parent=5 // pred_region
        %s352 = ssub.s32 %s21, 1
        // Predicated region
        $region13: #{res_block_forward.1} parent=11 // pred_check
          %p353 = pneg %p142
        $region14: #{res_block_forward.1} parent=11 // pred_check_branch
          %355 = sbr.rel (%p353) target = $region16
        $region15: #{res_block_forward.1} parent=11 // pred_region
          _
        $region16: #{res_block_forward.1} parent=11 // pred_fallthru
          _
        // Predicated region
        $region17: #{res_block_forward.1} parent=11 // pred_check
          %p356 = pneg %p163
        $region18: #{res_block_forward.1} parent=11 // pred_check_branch
          %358 = sbr.rel (%p356) target = $region20
        $region19: #{res_block_forward.1} parent=11 // pred_region
          _
        $region20: #{res_block_forward.1} parent=11 // pred_fallthru
          _
        // Predicated region
        $region21: #{res_block_forward.1} parent=11 // pred_check
          %p359 = pneg %p184
        $region22: #{res_block_forward.1} parent=11 // pred_check_branch
          %361 = sbr.rel (%p359) target = $region24
        $region23: #{res_block_forward.1} parent=11 // pred_region
          _
        $region24: #{res_block_forward.1} parent=11 // pred_fallthru
          _
        // Predicated region
        $region25: #{res_block_forward.1} parent=11 // pred_check
          %p362 = pneg %p205
        $region26: #{res_block_forward.1} parent=11 // pred_check_branch
          %364 = sbr.rel (%p362) target = $region28
        $region27: #{res_block_forward.1} parent=11 // pred_region
          _
        $region28: #{res_block_forward.1} parent=11 // pred_fallthru
          _
        // Predicated region
        $region29: #{res_block_forward.1} parent=11 // pred_check
          %p365 = pneg %p226
        $region30: #{res_block_forward.1} parent=11 // pred_check_branch
          %367 = sbr.rel (%p365) target = $region32
        $region31: #{res_block_forward.1} parent=11 // pred_region
          _
        $region32: #{res_block_forward.1} parent=11 // pred_fallthru
          _
        // Predicated region
        $region33: #{res_block_forward.1} parent=11 // pred_check
          %p368 = pneg %p247
        $region34: #{res_block_forward.1} parent=11 // pred_check_branch
          %370 = sbr.rel (%p368) target = $region36
        $region35: #{res_block_forward.1} parent=11 // pred_region
          _
        $region36: #{res_block_forward.1} parent=11 // pred_fallthru
          _
        // Predicated region
        $region37: #{res_block_forward.1} parent=11 // pred_check
          %p371 = pneg %p268
        $region38: #{res_block_forward.1} parent=11 // pred_check_branch
          %373 = sbr.rel (%p371) target = $region40
        $region39: #{res_block_forward.1} parent=11 // pred_region
          _
        $region40: #{res_block_forward.1} parent=11 // pred_fallthru
          _
        // Predicated region
        $region41: #{res_block_forward.1} parent=11 // pred_check
          %p374 = pneg %p289
        $region42: #{res_block_forward.1} parent=11 // pred_check_branch
          %376 = sbr.rel (%p374) target = $region44
        $region43: #{res_block_forward.1} parent=11 // pred_region
          _
        $region44: #{res_block_forward.1} parent=11 // pred_fallthru
          _
        // Predicated region
        $region45: #{res_block_forward.1} parent=11 // pred_check
          %p377 = pneg %p310
        $region46: #{res_block_forward.1} parent=11 // pred_check_branch
          %379 = sbr.rel (%p377) target = $region48
        $region47: #{res_block_forward.1} parent=11 // pred_region
          _
        $region48: #{res_block_forward.1} parent=11 // pred_fallthru
          _
      $region12: #{res_block_forward.1} parent=5 // pred_fallthru
        _
      %p380 = scmp.lt.s32.totalorder %s21, 8
      // Predicated region
      $region49: #{res_block_forward.1} parent=5 // pred_check
        %p381 = pneg %p380
      $region50: #{res_block_forward.1} parent=5 // pred_check_branch
        %383 = sbr.rel (%p381) target = $region52
      $region51: #{res_block_forward.1} parent=5 // pred_region
        // Predicated region
        $region53: #{res_block_forward.1} parent=51 // pred_check
          %p384 = pneg %p55
        $region54: #{res_block_forward.1} parent=51 // pred_check_branch
          %386 = sbr.rel (%p384) target = $region56
        $region55: #{res_block_forward.1} parent=51 // pred_region
          %p387 = scmp.lt.s32.totalorder %s28, 1
          %s388 = scalar_select %p387, %s28, 1
          %p389 = scmp.lt.s32.totalorder %s29, 5
          %s390 = scalar_select %p389, %s29, 5
          %s391 = smul.addr %s390, 8
          %s392 = smul.addr %s388, 48
          %s393 = sadd.s32 %s391, %s392
          %s394 = smul.addr %s393, 4
          %s395 = scalar_lea.vmem %s0, %s394
        $region56: #{res_block_forward.1} parent=51 // pred_fallthru
          _
        // Predicated region
        $region57: #{res_block_forward.1} parent=51 // pred_check
          %p396 = pneg %p85
        $region58: #{res_block_forward.1} parent=51 // pred_check_branch
          %398 = sbr.rel (%p396) target = $region60
        $region59: #{res_block_forward.1} parent=51 // pred_region
          %s399 = sadd.s32 %s29, 1
          %p400 = scmp.lt.s32.totalorder %s28, 1
          %s401 = scalar_select %p400, %s28, 1
          %p402 = scmp.lt.s32.totalorder %s399, 5
          %s403 = scalar_select %p402, %s399, 5
          %s404 = smul.addr %s403, 8
          %s405 = smul.addr %s401, 48
          %s406 = sadd.s32 %s404, %s405
          %s407 = smul.addr %s406, 4
          %s408 = scalar_lea.vmem %s1, %s407
          %s409 = sadd.s32 %s29, 1
        $region60: #{res_block_forward.1} parent=51 // pred_fallthru
          _
        // Predicated region
        $region61: #{res_block_forward.1} parent=51 // pred_check
          %p410 = pneg %p115
        $region62: #{res_block_forward.1} parent=51 // pred_check_branch
          %412 = sbr.rel (%p410) target = $region64
        $region63: #{res_block_forward.1} parent=51 // pred_region
          %s413 = sadd.s32 %s29, 2
          %p414 = scmp.lt.s32.totalorder %s28, 1
          %s415 = scalar_select %p414, %s28, 1
          %p416 = scmp.lt.s32.totalorder %s413, 5
          %s417 = scalar_select %p416, %s413, 5
          %s418 = smul.addr %s417, 8
          %s419 = smul.addr %s415, 48
          %s420 = sadd.s32 %s418, %s419
          %s421 = smul.addr %s420, 4
          %s422 = scalar_lea.vmem %s2, %s421
          %s423 = sadd.s32 %s29, 2
        $region64: #{res_block_forward.1} parent=51 // pred_fallthru
          _
      $region52: #{res_block_forward.1} parent=5 // pred_fallthru
        _
      %p424 = scmp.le.s32.totalorder 1, %s21
      %p425 = scmp.lt.s32.totalorder %s21, 9
      %p426 = pnand %p424, %p425
      %p427 = pneg %p426
      // Predicated region
      $region65: #{res_block_forward.1} parent=5 // pred_check
        _
      $region66: #{res_block_forward.1} parent=5 // pred_check_branch
        %429 = sbr.rel (%p426) target = $region68
      $region67: #{res_block_forward.1} parent=5 // pred_region
        %s430 = ssub.s32 %s21, 1
        %p431 = scmp.lt.s32.totalorder %s30, 1
        %s432 = scalar_select %p431, %s30, 1
        %p433 = scmp.lt.s32.totalorder %s31, 5
        %s434 = scalar_select %p433, %s31, 5
        %s435 = smul.addr %s434, 8
        %s436 = smul.addr %s432, 48
        %s437 = sadd.s32 %s435, %s436
        %s438 = smul.addr %s437, 4
        %s439 = scalar_lea.vmem %s0, %s438
        %p440 = pneg %p61
        %p441 = pneg %p58
        %s442 = sadd.s32 %s31, 1
        %p443 = scmp.lt.s32.totalorder %s30, 1
        %s444 = scalar_select %p443, %s30, 1
        %p445 = scmp.lt.s32.totalorder %s442, 5
        %s446 = scalar_select %p445, %s442, 5
        %s447 = smul.addr %s446, 8
        %s448 = smul.addr %s444, 48
        %s449 = sadd.s32 %s447, %s448
        %s450 = smul.addr %s449, 4
        %s451 = scalar_lea.vmem %s1, %s450
        %p452 = pneg %p91
        %p453 = pneg %p88
        %s454 = sadd.s32 %s31, 2
        %p455 = scmp.lt.s32.totalorder %s30, 1
        %s456 = scalar_select %p455, %s30, 1
        %p457 = scmp.lt.s32.totalorder %s454, 5
        %s458 = scalar_select %p457, %s454, 5
        %s459 = smul.addr %s458, 8
        %s460 = smul.addr %s456, 48
        %s461 = sadd.s32 %s459, %s460
        %s462 = smul.addr %s461, 4
        %s463 = scalar_lea.vmem %s2, %s462
        %p464 = pneg %p121
        %p465 = pneg %p118
        %p466 = pneg %p142
        %p467 = pneg %p139
        %p468 = pneg %p163
        %p469 = pneg %p160
        %p470 = pneg %p184
        %p471 = pneg %p181
        %p472 = pneg %p205
        %p473 = pneg %p202
        %p474 = pneg %p226
        %p475 = pneg %p223
        %p476 = pneg %p247
        %p477 = pneg %p244
        %p478 = pneg %p268
        %p479 = pneg %p265
        %p480 = pneg %p289
        %p481 = pneg %p286
        %p482 = pneg %p310
        %p483 = pneg %p307
        %p484 = pneg %p338
        %p485 = pneg %p335
        %s486 = sand.u32 %s325, 1
        %s487 = scalar_lea.sflag [#allocation3], %s486
        %s488 = sand.u32 %s325, 1
        %s489 = smul.addr %s488, 16
        %s490 = scalar_lea.vmem [#allocation2], %s489
        %p491 = scmp.lt.s32.totalorder %s30, 1
        %s492 = scalar_select %p491, %s30, 1
        %p493 = scmp.lt.s32.totalorder %s31, 5
        %s494 = scalar_select %p493, %s31, 5
        %s495 = smul.addr %s494, 8
        %s496 = smul.addr %s492, 48
        %s497 = sadd.s32 %s495, %s496
        %s498 = smul.addr %s497, 4
        %s499 = scalar_lea.vmem %s0, %s498
        %s500 = sadd.s32 %s31, 1
        %p501 = scmp.lt.s32.totalorder %s30, 1
        %s502 = scalar_select %p501, %s30, 1
        %p503 = scmp.lt.s32.totalorder %s500, 5
        %s504 = scalar_select %p503, %s500, 5
        %s505 = smul.addr %s504, 8
        %s506 = smul.addr %s502, 48
        %s507 = sadd.s32 %s505, %s506
        %s508 = smul.addr %s507, 4
        %s509 = scalar_lea.vmem %s1, %s508
        %s510 = sadd.s32 %s31, 1
        %s511 = sadd.s32 %s31, 2
        %p512 = scmp.lt.s32.totalorder %s30, 1
        %s513 = scalar_select %p512, %s30, 1
        %p514 = scmp.lt.s32.totalorder %s511, 5
        %s515 = scalar_select %p514, %s511, 5
        %s516 = smul.addr %s515, 8
        %s517 = smul.addr %s513, 48
        %s518 = sadd.s32 %s516, %s517
        %s519 = smul.addr %s518, 4
        %s520 = scalar_lea.vmem %s2, %s519
        %s521 = sadd.s32 %s31, 2
        %v523 = vld [vmem:[%s499] sm:$0xf]
        %v524 = vld [vmem:[%s499 + $0x4] sm:$0xf]
        %v525 = vld [vmem:[%s499 + $0x8] sm:$0xf]
        %v526 = vld [vmem:[%s499 + $0xc] sm:$0xf]
        %v527 = vld [vmem:[%s499 + $0x10] sm:$0xf]
        %v528 = vld [vmem:[%s499 + $0x14] sm:$0xf]
        %v529 = vld [vmem:[%s499 + $0x18] sm:$0xf]
        %v530 = vld [vmem:[%s499 + $0x1c] sm:$0xf]
        %v531 = vld [vmem:[%s3] sm:$0x3]
        %v532 = vld [vmem:[%s509] sm:$0xf]
        %v533 = vld [vmem:[%s509 + $0x4] sm:$0xf]
        %v534 = vld [vmem:[%s509 + $0x8] sm:$0xf]
        %v535 = vld [vmem:[%s509 + $0xc] sm:$0xf]
        %v536 = vld [vmem:[%s509 + $0x10] sm:$0xf]
        %v537 = vld [vmem:[%s509 + $0x14] sm:$0xf]
        %v538 = vld [vmem:[%s509 + $0x18] sm:$0xf]
        %v539 = vld [vmem:[%s509 + $0x1c] sm:$0xf]
        %s540 = scalar_lea.vmem %s3, 2
        %v541 = vld [vmem:[%s540] sm:$0x3]
        %v550 = vunpack.c.l.b16 %v532
        %v551 = vunpack.c.l.b16 %v533
        %v552 = vunpack.c.l.b16 %v534
        %v553 = vunpack.c.l.b16 %v535
        %v554 = vunpack.c.l.b16 %v536
        %v555 = vunpack.c.l.b16 %v537
        %v556 = vunpack.c.l.b16 %v538
        %v557 = vunpack.c.l.b16 %v539
        %v558 = vpack.c.b16 %v551, %v550
        %v559 = vpack.c.b16 %v553, %v552
        %v560 = vpack.c.b16 %v555, %v554
        %v561 = vpack.c.b16 %v557, %v556
        %vm562 = vcmask 31744
        %v564 = vsel %vm562, %v558, 0
        %v567 = vsel %vm562, %v559, 0
        %v570 = vsel %vm562, %v560, 0
        %v573 = vsel %vm562, %v561, 0
        %vm575 = vcmask 1041408
        %v577 = vsel %vm575, %v541, 0
        %579 = vmatprep.subr.bf16.mxu0 0
        %580 = vmatpush1.bf16.msra.mxu0 0
        %581 = vmatprep.subr.bf16.mxu0 0
        %582 = vmatpush1.bf16.msra.mxu0 0
        %583 = vmatprep.subr.bf16.mxu0 0
        %584 = vmatpush1.bf16.msra.mxu0 0
        %585 = vmatprep.subr.bf16.mxu0 0
        %586 = vmatpush1.bf16.msra.mxu0 0
        %587 = vmatprep.subr.bf16.mxu0 0
        %588 = vmatpush1.bf16.msra.mxu0 0
        %589 = vmatprep.subr.bf16.mxu0 0
        %590 = vmatpush1.bf16.msra.mxu0 0
        %591 = vmatprep.subr.bf16.mxu0 0
        %592 = vmatpush1.bf16.msra.mxu0 0
        %593 = vmatprep.subr.bf16.mxu0 0
        %594 = vmatpush1.bf16.msra.mxu0 %v577
        %595 = vmatprep.subr.bf16.mxu0 0
        %596 = vmatpush2.bf16.msra.mxu0 0
        %597 = vmatprep.subr.bf16.mxu0 0
        %598 = vmatpush2.bf16.msra.mxu0 0
        %599 = vmatprep.subr.bf16.mxu0 0
        %600 = vmatpush2.bf16.msra.mxu0 0
        %601 = vmatprep.subr.bf16.mxu0 0
        %602 = vmatpush2.bf16.msra.mxu0 0
        %603 = vmatprep.subr.bf16.mxu0 0
        %604 = vmatpush2.bf16.msra.mxu0 0
        %605 = vmatprep.subr.bf16.mxu0 0
        %606 = vmatpush2.bf16.msra.mxu0 0
        %607 = vmatprep.subr.bf16.mxu0 0
        %608 = vmatpush2.bf16.msra.mxu0 0
        %609 = vmatprep.subr.bf16.mxu0 0
        %610 = vmatpush2.bf16.msra.mxu0 0
        %611 = vmatprep.mubr.bf16.mxu0 0
        %612 = vmatmul.mubr.bf16.gmra.mxu0 %v564
        %v613 = vpop.f32.mrf.mxu0
        %v614 = vadd.f32 0.0, %v613
        %v615 = vpop.f32.mrf.mxu0
        %v616 = vpop.f32.mrf.mxu0
        %v617 = vadd.f32 0.0, %v616
        %v618 = vpop.f32.mrf.mxu0
        %619 = vmatprep.mubr.bf16.mxu0 0
        %620 = vmatmul.mubr.bf16.gmra.mxu0 %v567
        %v621 = vpop.f32.mrf.mxu0
        %v622 = vadd.f32 0.0, %v621
        %v623 = vpop.f32.mrf.mxu0
        %v624 = vpop.f32.mrf.mxu0
        %v625 = vadd.f32 0.0, %v624
        %v626 = vpop.f32.mrf.mxu0
        %627 = vmatprep.mubr.bf16.mxu0 0
        %628 = vmatmul.mubr.bf16.gmra.mxu0 %v570
        %v629 = vpop.f32.mrf.mxu0
        %v630 = vadd.f32 0.0, %v629
        %v631 = vpop.f32.mrf.mxu0
        %v632 = vpop.f32.mrf.mxu0
        %v633 = vadd.f32 0.0, %v632
        %v634 = vpop.f32.mrf.mxu0
        %635 = vmatprep.mubr.bf16.mxu0 0
        %636 = vmatmul.mubr.bf16.gmra.mxu0 %v573
        %v637 = vpop.f32.mrf.mxu0
        %v638 = vadd.f32 0.0, %v637
        %v639 = vpop.f32.mrf.mxu0
        %v640 = vpop.f32.mrf.mxu0
        %v641 = vadd.f32 0.0, %v640
        %v642 = vpop.f32.mrf.mxu0
        %643 = vdwg.mxu0
        %v652 = vunpack.c.l.b16 %v523
        %v653 = vunpack.c.l.b16 %v524
        %v654 = vunpack.c.l.b16 %v525
        %v655 = vunpack.c.l.b16 %v526
        %v656 = vunpack.c.l.b16 %v527
        %v657 = vunpack.c.l.b16 %v528
        %v658 = vunpack.c.l.b16 %v529
        %v659 = vunpack.c.l.b16 %v530
        %v660 = vpack.c.b16 %v653, %v652
        %v661 = vpack.c.b16 %v655, %v654
        %v662 = vpack.c.b16 %v657, %v656
        %v663 = vpack.c.b16 %v659, %v658
        %v665 = vsel %vm562, %v660, 0
        %v668 = vsel %vm562, %v661, 0
        %v671 = vsel %vm562, %v662, 0
        %v674 = vsel %vm562, %v663, 0
        %v677 = vsel %vm575, %v531, 0
        %679 = vmatprep.subr.bf16.mxu0 0
        %680 = vmatpush1.bf16.msra.mxu0 0
        %681 = vmatprep.subr.bf16.mxu0 0
        %682 = vmatpush1.bf16.msra.mxu0 0
        %683 = vmatprep.subr.bf16.mxu0 0
        %684 = vmatpush1.bf16.msra.mxu0 0
        %685 = vmatprep.subr.bf16.mxu0 0
        %686 = vmatpush1.bf16.msra.mxu0 0
        %687 = vmatprep.subr.bf16.mxu0 0
        %688 = vmatpush1.bf16.msra.mxu0 0
        %689 = vmatprep.subr.bf16.mxu0 0
        %690 = vmatpush1.bf16.msra.mxu0 0
        %691 = vmatprep.subr.bf16.mxu0 0
        %692 = vmatpush1.bf16.msra.mxu0 0
        %693 = vmatprep.subr.bf16.mxu0 0
        %694 = vmatpush1.bf16.msra.mxu0 %v677
        %695 = vmatprep.subr.bf16.mxu0 0
        %696 = vmatpush2.bf16.msra.mxu0 0
        %697 = vmatprep.subr.bf16.mxu0 0
        %698 = vmatpush2.bf16.msra.mxu0 0
        %699 = vmatprep.subr.bf16.mxu0 0
        %700 = vmatpush2.bf16.msra.mxu0 0
        %701 = vmatprep.subr.bf16.mxu0 0
        %702 = vmatpush2.bf16.msra.mxu0 0
        %703 = vmatprep.subr.bf16.mxu0 0
        %704 = vmatpush2.bf16.msra.mxu0 0
        %705 = vmatprep.subr.bf16.mxu0 0
        %706 = vmatpush2.bf16.msra.mxu0 0
        %707 = vmatprep.subr.bf16.mxu0 0
        %708 = vmatpush2.bf16.msra.mxu0 0
        %709 = vmatprep.subr.bf16.mxu0 0
        %710 = vmatpush2.bf16.msra.mxu0 0
        %711 = vmatprep.mubr.bf16.mxu0 0
        %712 = vmatmul.mubr.bf16.gmra.mxu0 %v665
        %v713 = vpop.f32.mrf.mxu0
        %v714 = vadd.f32 %v614, %v713
        %v715 = vpop.f32.mrf.mxu0
        %v716 = vpop.f32.mrf.mxu0
        %v717 = vadd.f32 %v617, %v716
        %v718 = vpop.f32.mrf.mxu0
        %719 = vmatprep.mubr.bf16.mxu0 0
        %720 = vmatmul.mubr.bf16.gmra.mxu0 %v668
        %v721 = vpop.f32.mrf.mxu0
        %v722 = vadd.f32 %v622, %v721
        %v723 = vpop.f32.mrf.mxu0
        %v724 = vpop.f32.mrf.mxu0
        %v725 = vadd.f32 %v625, %v724
        %v726 = vpop.f32.mrf.mxu0
        %727 = vmatprep.mubr.bf16.mxu0 0
        %728 = vmatmul.mubr.bf16.gmra.mxu0 %v671
        %v729 = vpop.f32.mrf.mxu0
        %v730 = vadd.f32 %v630, %v729
        %v731 = vpop.f32.mrf.mxu0
        %v732 = vpop.f32.mrf.mxu0
        %v733 = vadd.f32 %v633, %v732
        %v734 = vpop.f32.mrf.mxu0
        %735 = vmatprep.mubr.bf16.mxu0 0
        %736 = vmatmul.mubr.bf16.gmra.mxu0 %v674
        %v737 = vpop.f32.mrf.mxu0
        %v738 = vadd.f32 %v638, %v737
        %v739 = vpop.f32.mrf.mxu0
        %v740 = vpop.f32.mrf.mxu0
        %v741 = vadd.f32 %v641, %v740
        %v742 = vpop.f32.mrf.mxu0
        %743 = vdwg.mxu0
        %v744 = vld [vmem:[%s520] sm:$0xf]
        %v745 = vld [vmem:[%s520 + $0x4] sm:$0xf]
        %v746 = vld [vmem:[%s520 + $0x8] sm:$0xf]
        %v747 = vld [vmem:[%s520 + $0xc] sm:$0xf]
        %v748 = vld [vmem:[%s520 + $0x10] sm:$0xf]
        %v749 = vld [vmem:[%s520 + $0x14] sm:$0xf]
        %v750 = vld [vmem:[%s520 + $0x18] sm:$0xf]
        %v751 = vld [vmem:[%s520 + $0x1c] sm:$0xf]
        %s752 = scalar_lea.vmem %s3, 4
        %v753 = vld [vmem:[%s752] sm:$0x3]
        %v762 = vunpack.c.l.b16 %v744
        %v763 = vunpack.c.l.b16 %v745
        %v764 = vunpack.c.l.b16 %v746
        %v765 = vunpack.c.l.b16 %v747
        %v766 = vunpack.c.l.b16 %v748
        %v767 = vunpack.c.l.b16 %v749
        %v768 = vunpack.c.l.b16 %v750
        %v769 = vunpack.c.l.b16 %v751
        %v770 = vpack.c.b16 %v763, %v762
        %v771 = vpack.c.b16 %v765, %v764
        %v772 = vpack.c.b16 %v767, %v766
        %v773 = vpack.c.b16 %v769, %v768
        %v775 = vsel %vm562, %v770, 0
        %v778 = vsel %vm562, %v771, 0
        %v781 = vsel %vm562, %v772, 0
        %v784 = vsel %vm562, %v773, 0
        %v787 = vsel %vm575, %v753, 0
        %789 = vmatprep.subr.bf16.mxu0 0
        %790 = vmatpush1.bf16.msra.mxu0 0
        %791 = vmatprep.subr.bf16.mxu0 0
        %792 = vmatpush1.bf16.msra.mxu0 0
        %793 = vmatprep.subr.bf16.mxu0 0
        %794 = vmatpush1.bf16.msra.mxu0 0
        %795 = vmatprep.subr.bf16.mxu0 0
        %796 = vmatpush1.bf16.msra.mxu0 0
        %797 = vmatprep.subr.bf16.mxu0 0
        %798 = vmatpush1.bf16.msra.mxu0 0
        %799 = vmatprep.subr.bf16.mxu0 0
        %800 = vmatpush1.bf16.msra.mxu0 0
        %801 = vmatprep.subr.bf16.mxu0 0
        %802 = vmatpush1.bf16.msra.mxu0 0
        %803 = vmatprep.subr.bf16.mxu0 0
        %804 = vmatpush1.bf16.msra.mxu0 %v787
        %805 = vmatprep.subr.bf16.mxu0 0
        %806 = vmatpush2.bf16.msra.mxu0 0
        %807 = vmatprep.subr.bf16.mxu0 0
        %808 = vmatpush2.bf16.msra.mxu0 0
        %809 = vmatprep.subr.bf16.mxu0 0
        %810 = vmatpush2.bf16.msra.mxu0 0
        %811 = vmatprep.subr.bf16.mxu0 0
        %812 = vmatpush2.bf16.msra.mxu0 0
        %813 = vmatprep.subr.bf16.mxu0 0
        %814 = vmatpush2.bf16.msra.mxu0 0
        %815 = vmatprep.subr.bf16.mxu0 0
        %816 = vmatpush2.bf16.msra.mxu0 0
        %817 = vmatprep.subr.bf16.mxu0 0
        %818 = vmatpush2.bf16.msra.mxu0 0
        %819 = vmatprep.subr.bf16.mxu0 0
        %820 = vmatpush2.bf16.msra.mxu0 0
        %821 = vmatprep.mubr.bf16.mxu0 0
        %822 = vmatmul.mubr.bf16.gmra.mxu0 %v775
        %v823 = vpop.f32.mrf.mxu0
        %v824 = vadd.f32 0.0, %v823
        %v825 = vpop.f32.mrf.mxu0
        %v826 = vpop.f32.mrf.mxu0
        %v827 = vadd.f32 0.0, %v826
        %v828 = vpop.f32.mrf.mxu0
        %829 = vmatprep.mubr.bf16.mxu0 0
        %830 = vmatmul.mubr.bf16.gmra.mxu0 %v778
        %v831 = vpop.f32.mrf.mxu0
        %v832 = vadd.f32 0.0, %v831
        %v833 = vpop.f32.mrf.mxu0
        %v834 = vpop.f32.mrf.mxu0
        %v835 = vadd.f32 0.0, %v834
        %v836 = vpop.f32.mrf.mxu0
        %837 = vmatprep.mubr.bf16.mxu0 0
        %838 = vmatmul.mubr.bf16.gmra.mxu0 %v781
        %v839 = vpop.f32.mrf.mxu0
        %v840 = vadd.f32 0.0, %v839
        %v841 = vpop.f32.mrf.mxu0
        %v842 = vpop.f32.mrf.mxu0
        %v843 = vadd.f32 0.0, %v842
        %v844 = vpop.f32.mrf.mxu0
        %845 = vmatprep.mubr.bf16.mxu0 0
        %846 = vmatmul.mubr.bf16.gmra.mxu0 %v784
        %v847 = vpop.f32.mrf.mxu0
        %v848 = vadd.f32 0.0, %v847
        %v849 = vpop.f32.mrf.mxu0
        %v850 = vpop.f32.mrf.mxu0
        %v851 = vadd.f32 0.0, %v850
        %v852 = vpop.f32.mrf.mxu0
        %853 = vdwg.mxu0
        %v854 = vadd.f32 %v714, %v824
        %v855 = vadd.f32 %v717, %v827
        %v856 = vadd.f32 %v722, %v832
        %v857 = vadd.f32 %v725, %v835
        %v858 = vadd.f32 %v730, %v840
        %v859 = vadd.f32 %v733, %v843
        %v860 = vadd.f32 %v738, %v848
        %v861 = vadd.f32 %v741, %v851
        %v862 = vld [vmem:[%s4] sm:$0x1]
        %v864 = vlaneseq
        %v865 = vshrl.u32 %v864, 7
        %v866 = vsub.s32 0, %v865
        %v867 = vrot.slane %v862, %v866
        %v869 = vadd.f32 %v854, %v867
        %v870 = vadd.f32 %v855, %v867
        %v871 = vadd.f32 %v856, %v867
        %v872 = vadd.f32 %v857, %v867
        %v873 = vadd.f32 %v858, %v867
        %v874 = vadd.f32 %v859, %v867
        %v875 = vadd.f32 %v860, %v867
        %v876 = vadd.f32 %v861, %v867
        %v877 = vmax.f32 %v869, 0.0
        %v878 = vmax.f32 %v870, 0.0
        %v879 = vmax.f32 %v871, 0.0
        %v880 = vmax.f32 %v872, 0.0
        %v881 = vmax.f32 %v873, 0.0
        %v882 = vmax.f32 %v874, 0.0
        %v883 = vmax.f32 %v875, 0.0
        %v884 = vmax.f32 %v876, 0.0
        %v885 = vpack.c.bf16 %v878, %v877
        %v886 = vpack.c.bf16 %v880, %v879
        %v887 = vpack.c.bf16 %v882, %v881
        %v888 = vpack.c.bf16 %v884, %v883
        %v889 = vld [vmem:[%s5] sm:$0xf]
        %v890 = vld [vmem:[%s5 + $0x4] sm:$0xf]
        %v893 = vunpack.c.l.b16 %v889
        %v894 = vunpack.c.l.b16 %v890
        %v895 = vpack.c.b16 %v894, %v893
        %vm896 = vcmask 523264
        %v898 = vsel %vm896, %v895, 0
        %900 = vmatprep.subr.bf16.mxu0 0
        %901 = vmatpush1.bf16.msra.mxu0 0
        %902 = vmatprep.subr.bf16.mxu0 0
        %903 = vmatpush1.bf16.msra.mxu0 0
        %904 = vmatprep.subr.bf16.mxu0 0
        %905 = vmatpush1.bf16.msra.mxu0 0
        %906 = vmatprep.subr.bf16.mxu0 0
        %907 = vmatpush1.bf16.msra.mxu0 0
        %908 = vmatprep.subr.bf16.mxu0 0
        %909 = vmatpush1.bf16.msra.mxu0 %v888
        %910 = vmatprep.subr.bf16.mxu0 0
        %911 = vmatpush1.bf16.msra.mxu0 %v887
        %912 = vmatprep.subr.bf16.mxu0 0
        %913 = vmatpush1.bf16.msra.mxu0 %v886
        %914 = vmatprep.subr.bf16.mxu0 0
        %915 = vmatpush1.bf16.msra.mxu0 %v885
        %916 = vmatprep.subr.bf16.mxu0 0
        %917 = vmatpush2.bf16.msra.mxu0 0
        %918 = vmatprep.subr.bf16.mxu0 0
        %919 = vmatpush2.bf16.msra.mxu0 0
        %920 = vmatprep.subr.bf16.mxu0 0
        %921 = vmatpush2.bf16.msra.mxu0 0
        %922 = vmatprep.subr.bf16.mxu0 0
        %923 = vmatpush2.bf16.msra.mxu0 0
        %924 = vmatprep.subr.bf16.mxu0 0
        %925 = vmatpush2.bf16.msra.mxu0 0
        %926 = vmatprep.subr.bf16.mxu0 0
        %927 = vmatpush2.bf16.msra.mxu0 0
        %928 = vmatprep.subr.bf16.mxu0 0
        %929 = vmatpush2.bf16.msra.mxu0 0
        %930 = vmatprep.subr.bf16.mxu0 0
        %931 = vmatpush2.bf16.msra.mxu0 0
        %932 = vmatprep.mubr.bf16.mxu0 0
        %933 = vmatmul.mubr.bf16.gmra.mxu0 %v898
        %v934 = vpop.f32.mrf.mxu0
        %v935 = vadd.f32 0.0, %v934
        %v936 = vpop.f32.mrf.mxu0
        %v937 = vpop.f32.mrf.mxu0
        %v938 = vadd.f32 0.0, %v937
        %v939 = vpop.f32.mrf.mxu0
        %940 = vdwg.mxu0
        %v941 = vpack.c.bf16 %v938, %v935
        %v942 = vld [vmem:[%s6] sm:$0xf]
        %s943 = scalar_lea.vmem %s5, 8
        %v944 = vld [vmem:[%s943] sm:$0xf]
        %v945 = vld [vmem:[%s943 + $0x4] sm:$0xf]
        %v948 = vunpack.c.l.b16 %v944
        %v949 = vunpack.c.l.b16 %v945
        %v950 = vpack.c.b16 %v949, %v948
        %v952 = vsel %vm896, %v950, 0
        %954 = vmatprep.subr.bf16.mxu0 0
        %955 = vmatpush1.bf16.msra.mxu0 0
        %956 = vmatprep.subr.bf16.mxu0 0
        %957 = vmatpush1.bf16.msra.mxu0 0
        %958 = vmatprep.subr.bf16.mxu0 0
        %959 = vmatpush1.bf16.msra.mxu0 0
        %960 = vmatprep.subr.bf16.mxu0 0
        %961 = vmatpush1.bf16.msra.mxu0 0
        %962 = vmatprep.subr.bf16.mxu0 0
        %963 = vmatpush1.bf16.msra.mxu0 %v888
        %964 = vmatprep.subr.bf16.mxu0 0
        %965 = vmatpush1.bf16.msra.mxu0 %v887
        %966 = vmatprep.subr.bf16.mxu0 0
        %967 = vmatpush1.bf16.msra.mxu0 %v886
        %968 = vmatprep.subr.bf16.mxu0 0
        %969 = vmatpush1.bf16.msra.mxu0 %v885
        %970 = vmatprep.subr.bf16.mxu0 0
        %971 = vmatpush2.bf16.msra.mxu0 0
        %972 = vmatprep.subr.bf16.mxu0 0
        %973 = vmatpush2.bf16.msra.mxu0 0
        %974 = vmatprep.subr.bf16.mxu0 0
        %975 = vmatpush2.bf16.msra.mxu0 0
        %976 = vmatprep.subr.bf16.mxu0 0
        %977 = vmatpush2.bf16.msra.mxu0 0
        %978 = vmatprep.subr.bf16.mxu0 0
        %979 = vmatpush2.bf16.msra.mxu0 0
        %980 = vmatprep.subr.bf16.mxu0 0
        %981 = vmatpush2.bf16.msra.mxu0 0
        %982 = vmatprep.subr.bf16.mxu0 0
        %983 = vmatpush2.bf16.msra.mxu0 0
        %984 = vmatprep.subr.bf16.mxu0 0
        %985 = vmatpush2.bf16.msra.mxu0 0
        %986 = vmatprep.mubr.bf16.mxu0 0
        %987 = vmatmul.mubr.bf16.gmra.mxu0 %v952
        %v988 = vpop.f32.mrf.mxu0
        %v989 = vadd.f32 0.0, %v988
        %v990 = vpop.f32.mrf.mxu0
        %v991 = vpop.f32.mrf.mxu0
        %v992 = vadd.f32 0.0, %v991
        %v993 = vpop.f32.mrf.mxu0
        %994 = vdwg.mxu0
        %v995 = vpack.c.bf16 %v992, %v989
        %s996 = scalar_lea.vmem %s6, 4
        %v997 = vld [vmem:[%s996] sm:$0xf]
        %vm998 = vcmask 64512
        %v1000 = vsel %vm998, %v995, 0
        %vm1002 = vcmask 1043456
        %v1004 = vsel %vm1002, %v997, 0
        %1006 = vmatprep.subr.bf16.mxu0 0
        %1007 = vmatpush1.bf16.msra.mxu0 0
        %1008 = vmatprep.subr.bf16.mxu0 0
        %1009 = vmatpush1.bf16.msra.mxu0 0
        %1010 = vmatprep.subr.bf16.mxu0 0
        %1011 = vmatpush1.bf16.msra.mxu0 0
        %1012 = vmatprep.subr.bf16.mxu0 0
        %1013 = vmatpush1.bf16.msra.mxu0 0
        %1014 = vmatprep.subr.bf16.mxu0 0
        %1015 = vmatpush1.bf16.msra.mxu0 0
        %1016 = vmatprep.subr.bf16.mxu0 0
        %1017 = vmatpush1.bf16.msra.mxu0 0
        %1018 = vmatprep.subr.bf16.mxu0 0
        %1019 = vmatpush1.bf16.msra.mxu0 0
        %1020 = vmatprep.subr.bf16.mxu0 0
        %1021 = vmatpush1.bf16.msra.mxu0 %v1004
        %1022 = vmatprep.subr.bf16.mxu0 0
        %1023 = vmatpush2.bf16.msra.mxu0 0
        %1024 = vmatprep.subr.bf16.mxu0 0
        %1025 = vmatpush2.bf16.msra.mxu0 0
        %1026 = vmatprep.subr.bf16.mxu0 0
        %1027 = vmatpush2.bf16.msra.mxu0 0
        %1028 = vmatprep.subr.bf16.mxu0 0
        %1029 = vmatpush2.bf16.msra.mxu0 0
        %1030 = vmatprep.subr.bf16.mxu0 0
        %1031 = vmatpush2.bf16.msra.mxu0 0
        %1032 = vmatprep.subr.bf16.mxu0 0
        %1033 = vmatpush2.bf16.msra.mxu0 0
        %1034 = vmatprep.subr.bf16.mxu0 0
        %1035 = vmatpush2.bf16.msra.mxu0 0
        %1036 = vmatprep.subr.bf16.mxu0 0
        %1037 = vmatpush2.bf16.msra.mxu0 0
        %1038 = vmatprep.mubr.bf16.mxu0 0
        %1039 = vmatmul.mubr.bf16.gmra.mxu0 %v1000
        %v1040 = vpop.f32.mrf.mxu0
        %v1041 = vadd.f32 0.0, %v1040
        %v1042 = vpop.f32.mrf.mxu0
        %v1043 = vpop.f32.mrf.mxu0
        %v1044 = vadd.f32 0.0, %v1043
        %v1045 = vpop.f32.mrf.mxu0
        %1046 = vdwg.mxu0
        %v1048 = vsel %vm998, %v941, 0
        %v1051 = vsel %vm1002, %v942, 0
        %1053 = vmatprep.subr.bf16.mxu0 0
        %1054 = vmatpush1.bf16.msra.mxu0 0
        %1055 = vmatprep.subr.bf16.mxu0 0
        %1056 = vmatpush1.bf16.msra.mxu0 0
        %1057 = vmatprep.subr.bf16.mxu0 0
        %1058 = vmatpush1.bf16.msra.mxu0 0
        %1059 = vmatprep.subr.bf16.mxu0 0
        %1060 = vmatpush1.bf16.msra.mxu0 0
        %1061 = vmatprep.subr.bf16.mxu0 0
        %1062 = vmatpush1.bf16.msra.mxu0 0
        %1063 = vmatprep.subr.bf16.mxu0 0
        %1064 = vmatpush1.bf16.msra.mxu0 0
        %1065 = vmatprep.subr.bf16.mxu0 0
        %1066 = vmatpush1.bf16.msra.mxu0 0
        %1067 = vmatprep.subr.bf16.mxu0 0
        %1068 = vmatpush1.bf16.msra.mxu0 %v1051
        %1069 = vmatprep.subr.bf16.mxu0 0
        %1070 = vmatpush2.bf16.msra.mxu0 0
        %1071 = vmatprep.subr.bf16.mxu0 0
        %1072 = vmatpush2.bf16.msra.mxu0 0
        %1073 = vmatprep.subr.bf16.mxu0 0
        %1074 = vmatpush2.bf16.msra.mxu0 0
        %1075 = vmatprep.subr.bf16.mxu0 0
        %1076 = vmatpush2.bf16.msra.mxu0 0
        %1077 = vmatprep.subr.bf16.mxu0 0
        %1078 = vmatpush2.bf16.msra.mxu0 0
        %1079 = vmatprep.subr.bf16.mxu0 0
        %1080 = vmatpush2.bf16.msra.mxu0 0
        %1081 = vmatprep.subr.bf16.mxu0 0
        %1082 = vmatpush2.bf16.msra.mxu0 0
        %1083 = vmatprep.subr.bf16.mxu0 0
        %1084 = vmatpush2.bf16.msra.mxu0 0
        %1085 = vmatprep.mubr.bf16.mxu0 0
        %1086 = vmatmul.mubr.bf16.gmra.mxu0 %v1048
        %v1087 = vpop.f32.mrf.mxu0
        %v1088 = vadd.f32 %v1041, %v1087
        %v1089 = vpop.f32.mrf.mxu0
        %v1090 = vpop.f32.mrf.mxu0
        %v1091 = vadd.f32 %v1044, %v1090
        %v1092 = vpop.f32.mrf.mxu0
        %1093 = vdwg.mxu0
        %s1094 = scalar_lea.vmem %s5, 16
        %v1095 = vld [vmem:[%s1094] sm:$0xf]
        %v1096 = vld [vmem:[%s1094 + $0x4] sm:$0xf]
        %v1099 = vunpack.c.l.b16 %v1095
        %v1100 = vunpack.c.l.b16 %v1096
        %v1101 = vpack.c.b16 %v1100, %v1099
        %v1103 = vsel %vm896, %v1101, 0
        %1105 = vmatprep.subr.bf16.mxu0 0
        %1106 = vmatpush1.bf16.msra.mxu0 0
        %1107 = vmatprep.subr.bf16.mxu0 0
        %1108 = vmatpush1.bf16.msra.mxu0 0
        %1109 = vmatprep.subr.bf16.mxu0 0
        %1110 = vmatpush1.bf16.msra.mxu0 0
        %1111 = vmatprep.subr.bf16.mxu0 0
        %1112 = vmatpush1.bf16.msra.mxu0 0
        %1113 = vmatprep.subr.bf16.mxu0 0
        %1114 = vmatpush1.bf16.msra.mxu0 %v888
        %1115 = vmatprep.subr.bf16.mxu0 0
        %1116 = vmatpush1.bf16.msra.mxu0 %v887
        %1117 = vmatprep.subr.bf16.mxu0 0
        %1118 = vmatpush1.bf16.msra.mxu0 %v886
        %1119 = vmatprep.subr.bf16.mxu0 0
        %1120 = vmatpush1.bf16.msra.mxu0 %v885
        %1121 = vmatprep.subr.bf16.mxu0 0
        %1122 = vmatpush2.bf16.msra.mxu0 0
        %1123 = vmatprep.subr.bf16.mxu0 0
        %1124 = vmatpush2.bf16.msra.mxu0 0
        %1125 = vmatprep.subr.bf16.mxu0 0
        %1126 = vmatpush2.bf16.msra.mxu0 0
        %1127 = vmatprep.subr.bf16.mxu0 0
        %1128 = vmatpush2.bf16.msra.mxu0 0
        %1129 = vmatprep.subr.bf16.mxu0 0
        %1130 = vmatpush2.bf16.msra.mxu0 0
        %1131 = vmatprep.subr.bf16.mxu0 0
        %1132 = vmatpush2.bf16.msra.mxu0 0
        %1133 = vmatprep.subr.bf16.mxu0 0
        %1134 = vmatpush2.bf16.msra.mxu0 0
        %1135 = vmatprep.subr.bf16.mxu0 0
        %1136 = vmatpush2.bf16.msra.mxu0 0
        %1137 = vmatprep.mubr.bf16.mxu0 0
        %1138 = vmatmul.mubr.bf16.gmra.mxu0 %v1103
        %v1139 = vpop.f32.mrf.mxu0
        %v1140 = vadd.f32 0.0, %v1139
        %v1141 = vpop.f32.mrf.mxu0
        %v1142 = vpop.f32.mrf.mxu0
        %v1143 = vadd.f32 0.0, %v1142
        %v1144 = vpop.f32.mrf.mxu0
        %1145 = vdwg.mxu0
        %v1146 = vpack.c.bf16 %v1143, %v1140
        %s1147 = scalar_lea.vmem %s6, 8
        %v1148 = vld [vmem:[%s1147] sm:$0xf]
        %v1150 = vsel %vm998, %v1146, 0
        %v1153 = vsel %vm1002, %v1148, 0
        %1155 = vmatprep.subr.bf16.mxu0 0
        %1156 = vmatpush1.bf16.msra.mxu0 0
        %1157 = vmatprep.subr.bf16.mxu0 0
        %1158 = vmatpush1.bf16.msra.mxu0 0
        %1159 = vmatprep.subr.bf16.mxu0 0
        %1160 = vmatpush1.bf16.msra.mxu0 0
        %1161 = vmatprep.subr.bf16.mxu0 0
        %1162 = vmatpush1.bf16.msra.mxu0 0
        %1163 = vmatprep.subr.bf16.mxu0 0
        %1164 = vmatpush1.bf16.msra.mxu0 0
        %1165 = vmatprep.subr.bf16.mxu0 0
        %1166 = vmatpush1.bf16.msra.mxu0 0
        %1167 = vmatprep.subr.bf16.mxu0 0
        %1168 = vmatpush1.bf16.msra.mxu0 0
        %1169 = vmatprep.subr.bf16.mxu0 0
        %1170 = vmatpush1.bf16.msra.mxu0 %v1153
        %1171 = vmatprep.subr.bf16.mxu0 0
        %1172 = vmatpush2.bf16.msra.mxu0 0
        %1173 = vmatprep.subr.bf16.mxu0 0
        %1174 = vmatpush2.bf16.msra.mxu0 0
        %1175 = vmatprep.subr.bf16.mxu0 0
        %1176 = vmatpush2.bf16.msra.mxu0 0
        %1177 = vmatprep.subr.bf16.mxu0 0
        %1178 = vmatpush2.bf16.msra.mxu0 0
        %1179 = vmatprep.subr.bf16.mxu0 0
        %1180 = vmatpush2.bf16.msra.mxu0 0
        %1181 = vmatprep.subr.bf16.mxu0 0
        %1182 = vmatpush2.bf16.msra.mxu0 0
        %1183 = vmatprep.subr.bf16.mxu0 0
        %1184 = vmatpush2.bf16.msra.mxu0 0
        %1185 = vmatprep.subr.bf16.mxu0 0
        %1186 = vmatpush2.bf16.msra.mxu0 0
        %1187 = vmatprep.mubr.bf16.mxu0 0
        %1188 = vmatmul.mubr.bf16.gmra.mxu0 %v1150
        %v1189 = vpop.f32.mrf.mxu0
        %v1190 = vadd.f32 0.0, %v1189
        %v1191 = vpop.f32.mrf.mxu0
        %v1192 = vpop.f32.mrf.mxu0
        %v1193 = vadd.f32 0.0, %v1192
        %v1194 = vpop.f32.mrf.mxu0
        %1195 = vdwg.mxu0
        %v1196 = vadd.f32 %v1088, %v1190
        %v1197 = vadd.f32 %v1091, %v1193
        %s1198 = scalar_lea.vmem %s5, 24
        %v1199 = vld [vmem:[%s1198] sm:$0xf]
        %v1200 = vld [vmem:[%s1198 + $0x4] sm:$0xf]
        %v1203 = vunpack.c.l.b16 %v1199
        %v1204 = vunpack.c.l.b16 %v1200
        %v1205 = vpack.c.b16 %v1204, %v1203
        %v1207 = vsel %vm896, %v1205, 0
        %1209 = vmatprep.subr.bf16.mxu0 0
        %1210 = vmatpush1.bf16.msra.mxu0 0
        %1211 = vmatprep.subr.bf16.mxu0 0
        %1212 = vmatpush1.bf16.msra.mxu0 0
        %1213 = vmatprep.subr.bf16.mxu0 0
        %1214 = vmatpush1.bf16.msra.mxu0 0
        %1215 = vmatprep.subr.bf16.mxu0 0
        %1216 = vmatpush1.bf16.msra.mxu0 0
        %1217 = vmatprep.subr.bf16.mxu0 0
        %1218 = vmatpush1.bf16.msra.mxu0 %v888
        %1219 = vmatprep.subr.bf16.mxu0 0
        %1220 = vmatpush1.bf16.msra.mxu0 %v887
        %1221 = vmatprep.subr.bf16.mxu0 0
        %1222 = vmatpush1.bf16.msra.mxu0 %v886
        %1223 = vmatprep.subr.bf16.mxu0 0
        %1224 = vmatpush1.bf16.msra.mxu0 %v885
        %1225 = vmatprep.subr.bf16.mxu0 0
        %1226 = vmatpush2.bf16.msra.mxu0 0
        %1227 = vmatprep.subr.bf16.mxu0 0
        %1228 = vmatpush2.bf16.msra.mxu0 0
        %1229 = vmatprep.subr.bf16.mxu0 0
        %1230 = vmatpush2.bf16.msra.mxu0 0
        %1231 = vmatprep.subr.bf16.mxu0 0
        %1232 = vmatpush2.bf16.msra.mxu0 0
        %1233 = vmatprep.subr.bf16.mxu0 0
        %1234 = vmatpush2.bf16.msra.mxu0 0
        %1235 = vmatprep.subr.bf16.mxu0 0
        %1236 = vmatpush2.bf16.msra.mxu0 0
        %1237 = vmatprep.subr.bf16.mxu0 0
        %1238 = vmatpush2.bf16.msra.mxu0 0
        %1239 = vmatprep.subr.bf16.mxu0 0
        %1240 = vmatpush2.bf16.msra.mxu0 0
        %1241 = vmatprep.mubr.bf16.mxu0 0
        %1242 = vmatmul.mubr.bf16.gmra.mxu0 %v1207
        %v1243 = vpop.f32.mrf.mxu0
        %v1244 = vadd.f32 0.0, %v1243
        %v1245 = vpop.f32.mrf.mxu0
        %v1246 = vpop.f32.mrf.mxu0
        %v1247 = vadd.f32 0.0, %v1246
        %v1248 = vpop.f32.mrf.mxu0
        %1249 = vdwg.mxu0
        %v1250 = vpack.c.bf16 %v1247, %v1244
        %s1251 = scalar_lea.vmem %s6, 12
        %v1252 = vld [vmem:[%s1251] sm:$0xf]
        %v1254 = vsel %vm998, %v1250, 0
        %v1257 = vsel %vm1002, %v1252, 0
        %1259 = vmatprep.subr.bf16.mxu0 0
        %1260 = vmatpush1.bf16.msra.mxu0 0
        %1261 = vmatprep.subr.bf16.mxu0 0
        %1262 = vmatpush1.bf16.msra.mxu0 0
        %1263 = vmatprep.subr.bf16.mxu0 0
        %1264 = vmatpush1.bf16.msra.mxu0 0
        %1265 = vmatprep.subr.bf16.mxu0 0
        %1266 = vmatpush1.bf16.msra.mxu0 0
        %1267 = vmatprep.subr.bf16.mxu0 0
        %1268 = vmatpush1.bf16.msra.mxu0 0
        %1269 = vmatprep.subr.bf16.mxu0 0
        %1270 = vmatpush1.bf16.msra.mxu0 0
        %1271 = vmatprep.subr.bf16.mxu0 0
        %1272 = vmatpush1.bf16.msra.mxu0 0
        %1273 = vmatprep.subr.bf16.mxu0 0
        %1274 = vmatpush1.bf16.msra.mxu0 %v1257
        %1275 = vmatprep.subr.bf16.mxu0 0
        %1276 = vmatpush2.bf16.msra.mxu0 0
        %1277 = vmatprep.subr.bf16.mxu0 0
        %1278 = vmatpush2.bf16.msra.mxu0 0
        %1279 = vmatprep.subr.bf16.mxu0 0
        %1280 = vmatpush2.bf16.msra.mxu0 0
        %1281 = vmatprep.subr.bf16.mxu0 0
        %1282 = vmatpush2.bf16.msra.mxu0 0
        %1283 = vmatprep.subr.bf16.mxu0 0
        %1284 = vmatpush2.bf16.msra.mxu0 0
        %1285 = vmatprep.subr.bf16.mxu0 0
        %1286 = vmatpush2.bf16.msra.mxu0 0
        %1287 = vmatprep.subr.bf16.mxu0 0
        %1288 = vmatpush2.bf16.msra.mxu0 0
        %1289 = vmatprep.subr.bf16.mxu0 0
        %1290 = vmatpush2.bf16.msra.mxu0 0
        %1291 = vmatprep.mubr.bf16.mxu0 0
        %1292 = vmatmul.mubr.bf16.gmra.mxu0 %v1254
        %v1293 = vpop.f32.mrf.mxu0
        %v1294 = vadd.f32 0.0, %v1293
        %v1295 = vpop.f32.mrf.mxu0
        %v1296 = vpop.f32.mrf.mxu0
        %v1297 = vadd.f32 0.0, %v1296
        %v1298 = vpop.f32.mrf.mxu0
        %1299 = vdwg.mxu0
        %v1300 = vadd.f32 %v1196, %v1294
        %v1301 = vadd.f32 %v1197, %v1297
        %s1302 = scalar_lea.vmem %s5, 32
        %v1303 = vld [vmem:[%s1302] sm:$0xf]
        %v1304 = vld [vmem:[%s1302 + $0x4] sm:$0xf]
        %v1307 = vunpack.c.l.b16 %v1303
        %v1308 = vunpack.c.l.b16 %v1304
        %v1309 = vpack.c.b16 %v1308, %v1307
        %v1311 = vsel %vm896, %v1309, 0
        %1313 = vmatprep.subr.bf16.mxu0 0
        %1314 = vmatpush1.bf16.msra.mxu0 0
        %1315 = vmatprep.subr.bf16.mxu0 0
        %1316 = vmatpush1.bf16.msra.mxu0 0
        %1317 = vmatprep.subr.bf16.mxu0 0
        %1318 = vmatpush1.bf16.msra.mxu0 0
        %1319 = vmatprep.subr.bf16.mxu0 0
        %1320 = vmatpush1.bf16.msra.mxu0 0
        %1321 = vmatprep.subr.bf16.mxu0 0
        %1322 = vmatpush1.bf16.msra.mxu0 %v888
        %1323 = vmatprep.subr.bf16.mxu0 0
        %1324 = vmatpush1.bf16.msra.mxu0 %v887
        %1325 = vmatprep.subr.bf16.mxu0 0
        %1326 = vmatpush1.bf16.msra.mxu0 %v886
        %1327 = vmatprep.subr.bf16.mxu0 0
        %1328 = vmatpush1.bf16.msra.mxu0 %v885
        %1329 = vmatprep.subr.bf16.mxu0 0
        %1330 = vmatpush2.bf16.msra.mxu0 0
        %1331 = vmatprep.subr.bf16.mxu0 0
        %1332 = vmatpush2.bf16.msra.mxu0 0
        %1333 = vmatprep.subr.bf16.mxu0 0
        %1334 = vmatpush2.bf16.msra.mxu0 0
        %1335 = vmatprep.subr.bf16.mxu0 0
        %1336 = vmatpush2.bf16.msra.mxu0 0
        %1337 = vmatprep.subr.bf16.mxu0 0
        %1338 = vmatpush2.bf16.msra.mxu0 0
        %1339 = vmatprep.subr.bf16.mxu0 0
        %1340 = vmatpush2.bf16.msra.mxu0 0
        %1341 = vmatprep.subr.bf16.mxu0 0
        %1342 = vmatpush2.bf16.msra.mxu0 0
        %1343 = vmatprep.subr.bf16.mxu0 0
        %1344 = vmatpush2.bf16.msra.mxu0 0
        %1345 = vmatprep.mubr.bf16.mxu0 0
        %1346 = vmatmul.mubr.bf16.gmra.mxu0 %v1311
        %v1347 = vpop.f32.mrf.mxu0
        %v1348 = vadd.f32 0.0, %v1347
        %v1349 = vpop.f32.mrf.mxu0
        %v1350 = vpop.f32.mrf.mxu0
        %v1351 = vadd.f32 0.0, %v1350
        %v1352 = vpop.f32.mrf.mxu0
        %1353 = vdwg.mxu0
        %v1354 = vpack.c.bf16 %v1351, %v1348
        %s1355 = scalar_lea.vmem %s6, 16
        %v1356 = vld [vmem:[%s1355] sm:$0xf]
        %v1358 = vsel %vm998, %v1354, 0
        %v1361 = vsel %vm1002, %v1356, 0
        %1363 = vmatprep.subr.bf16.mxu0 0
        %1364 = vmatpush1.bf16.msra.mxu0 0
        %1365 = vmatprep.subr.bf16.mxu0 0
        %1366 = vmatpush1.bf16.msra.mxu0 0
        %1367 = vmatprep.subr.bf16.mxu0 0
        %1368 = vmatpush1.bf16.msra.mxu0 0
        %1369 = vmatprep.subr.bf16.mxu0 0
        %1370 = vmatpush1.bf16.msra.mxu0 0
        %1371 = vmatprep.subr.bf16.mxu0 0
        %1372 = vmatpush1.bf16.msra.mxu0 0
        %1373 = vmatprep.subr.bf16.mxu0 0
        %1374 = vmatpush1.bf16.msra.mxu0 0
        %1375 = vmatprep.subr.bf16.mxu0 0
        %1376 = vmatpush1.bf16.msra.mxu0 0
        %1377 = vmatprep.subr.bf16.mxu0 0
        %1378 = vmatpush1.bf16.msra.mxu0 %v1361
        %1379 = vmatprep.subr.bf16.mxu0 0
        %1380 = vmatpush2.bf16.msra.mxu0 0
        %1381 = vmatprep.subr.bf16.mxu0 0
        %1382 = vmatpush2.bf16.msra.mxu0 0
        %1383 = vmatprep.subr.bf16.mxu0 0
        %1384 = vmatpush2.bf16.msra.mxu0 0
        %1385 = vmatprep.subr.bf16.mxu0 0
        %1386 = vmatpush2.bf16.msra.mxu0 0
        %1387 = vmatprep.subr.bf16.mxu0 0
        %1388 = vmatpush2.bf16.msra.mxu0 0
        %1389 = vmatprep.subr.bf16.mxu0 0
        %1390 = vmatpush2.bf16.msra.mxu0 0
        %1391 = vmatprep.subr.bf16.mxu0 0
        %1392 = vmatpush2.bf16.msra.mxu0 0
        %1393 = vmatprep.subr.bf16.mxu0 0
        %1394 = vmatpush2.bf16.msra.mxu0 0
        %1395 = vmatprep.mubr.bf16.mxu0 0
        %1396 = vmatmul.mubr.bf16.gmra.mxu0 %v1358
        %v1397 = vpop.f32.mrf.mxu0
        %v1398 = vadd.f32 0.0, %v1397
        %v1399 = vpop.f32.mrf.mxu0
        %v1400 = vpop.f32.mrf.mxu0
        %v1401 = vadd.f32 0.0, %v1400
        %v1402 = vpop.f32.mrf.mxu0
        %1403 = vdwg.mxu0
        %v1404 = vadd.f32 %v1300, %v1398
        %v1405 = vadd.f32 %v1301, %v1401
        %s1406 = scalar_lea.vmem %s5, 40
        %v1407 = vld [vmem:[%s1406] sm:$0xf]
        %v1408 = vld [vmem:[%s1406 + $0x4] sm:$0xf]
        %v1411 = vunpack.c.l.b16 %v1407
        %v1412 = vunpack.c.l.b16 %v1408
        %v1413 = vpack.c.b16 %v1412, %v1411
        %v1415 = vsel %vm896, %v1413, 0
        %1417 = vmatprep.subr.bf16.mxu0 0
        %1418 = vmatpush1.bf16.msra.mxu0 0
        %1419 = vmatprep.subr.bf16.mxu0 0
        %1420 = vmatpush1.bf16.msra.mxu0 0
        %1421 = vmatprep.subr.bf16.mxu0 0
        %1422 = vmatpush1.bf16.msra.mxu0 0
        %1423 = vmatprep.subr.bf16.mxu0 0
        %1424 = vmatpush1.bf16.msra.mxu0 0
        %1425 = vmatprep.subr.bf16.mxu0 0
        %1426 = vmatpush1.bf16.msra.mxu0 %v888
        %1427 = vmatprep.subr.bf16.mxu0 0
        %1428 = vmatpush1.bf16.msra.mxu0 %v887
        %1429 = vmatprep.subr.bf16.mxu0 0
        %1430 = vmatpush1.bf16.msra.mxu0 %v886
        %1431 = vmatprep.subr.bf16.mxu0 0
        %1432 = vmatpush1.bf16.msra.mxu0 %v885
        %1433 = vmatprep.subr.bf16.mxu0 0
        %1434 = vmatpush2.bf16.msra.mxu0 0
        %1435 = vmatprep.subr.bf16.mxu0 0
        %1436 = vmatpush2.bf16.msra.mxu0 0
        %1437 = vmatprep.subr.bf16.mxu0 0
        %1438 = vmatpush2.bf16.msra.mxu0 0
        %1439 = vmatprep.subr.bf16.mxu0 0
        %1440 = vmatpush2.bf16.msra.mxu0 0
        %1441 = vmatprep.subr.bf16.mxu0 0
        %1442 = vmatpush2.bf16.msra.mxu0 0
        %1443 = vmatprep.subr.bf16.mxu0 0
        %1444 = vmatpush2.bf16.msra.mxu0 0
        %1445 = vmatprep.subr.bf16.mxu0 0
        %1446 = vmatpush2.bf16.msra.mxu0 0
        %1447 = vmatprep.subr.bf16.mxu0 0
        %1448 = vmatpush2.bf16.msra.mxu0 0
        %1449 = vmatprep.mubr.bf16.mxu0 0
        %1450 = vmatmul.mubr.bf16.gmra.mxu0 %v1415
        %v1451 = vpop.f32.mrf.mxu0
        %v1452 = vadd.f32 0.0, %v1451
        %v1453 = vpop.f32.mrf.mxu0
        %v1454 = vpop.f32.mrf.mxu0
        %v1455 = vadd.f32 0.0, %v1454
        %v1456 = vpop.f32.mrf.mxu0
        %1457 = vdwg.mxu0
        %v1458 = vpack.c.bf16 %v1455, %v1452
        %s1459 = scalar_lea.vmem %s6, 20
        %v1460 = vld [vmem:[%s1459] sm:$0xf]
        %v1462 = vsel %vm998, %v1458, 0
        %v1465 = vsel %vm1002, %v1460, 0
        %1467 = vmatprep.subr.bf16.mxu0 0
        %1468 = vmatpush1.bf16.msra.mxu0 0
        %1469 = vmatprep.subr.bf16.mxu0 0
        %1470 = vmatpush1.bf16.msra.mxu0 0
        %1471 = vmatprep.subr.bf16.mxu0 0
        %1472 = vmatpush1.bf16.msra.mxu0 0
        %1473 = vmatprep.subr.bf16.mxu0 0
        %1474 = vmatpush1.bf16.msra.mxu0 0
        %1475 = vmatprep.subr.bf16.mxu0 0
        %1476 = vmatpush1.bf16.msra.mxu0 0
        %1477 = vmatprep.subr.bf16.mxu0 0
        %1478 = vmatpush1.bf16.msra.mxu0 0
        %1479 = vmatprep.subr.bf16.mxu0 0
        %1480 = vmatpush1.bf16.msra.mxu0 0
        %1481 = vmatprep.subr.bf16.mxu0 0
        %1482 = vmatpush1.bf16.msra.mxu0 %v1465
        %1483 = vmatprep.subr.bf16.mxu0 0
        %1484 = vmatpush2.bf16.msra.mxu0 0
        %1485 = vmatprep.subr.bf16.mxu0 0
        %1486 = vmatpush2.bf16.msra.mxu0 0
        %1487 = vmatprep.subr.bf16.mxu0 0
        %1488 = vmatpush2.bf16.msra.mxu0 0
        %1489 = vmatprep.subr.bf16.mxu0 0
        %1490 = vmatpush2.bf16.msra.mxu0 0
        %1491 = vmatprep.subr.bf16.mxu0 0
        %1492 = vmatpush2.bf16.msra.mxu0 0
        %1493 = vmatprep.subr.bf16.mxu0 0
        %1494 = vmatpush2.bf16.msra.mxu0 0
        %1495 = vmatprep.subr.bf16.mxu0 0
        %1496 = vmatpush2.bf16.msra.mxu0 0
        %1497 = vmatprep.subr.bf16.mxu0 0
        %1498 = vmatpush2.bf16.msra.mxu0 0
        %1499 = vmatprep.mubr.bf16.mxu0 0
        %1500 = vmatmul.mubr.bf16.gmra.mxu0 %v1462
        %v1501 = vpop.f32.mrf.mxu0
        %v1502 = vadd.f32 0.0, %v1501
        %v1503 = vpop.f32.mrf.mxu0
        %v1504 = vpop.f32.mrf.mxu0
        %v1505 = vadd.f32 0.0, %v1504
        %v1506 = vpop.f32.mrf.mxu0
        %1507 = vdwg.mxu0
        %v1508 = vadd.f32 %v1404, %v1502
        %v1509 = vadd.f32 %v1405, %v1505
        %s1510 = scalar_lea.vmem %s5, 48
        %v1511 = vld [vmem:[%s1510] sm:$0xf]
        %v1512 = vld [vmem:[%s1510 + $0x4] sm:$0xf]
        %v1515 = vunpack.c.l.b16 %v1511
        %v1516 = vunpack.c.l.b16 %v1512
        %v1517 = vpack.c.b16 %v1516, %v1515
        %v1519 = vsel %vm896, %v1517, 0
        %1521 = vmatprep.subr.bf16.mxu0 0
        %1522 = vmatpush1.bf16.msra.mxu0 0
        %1523 = vmatprep.subr.bf16.mxu0 0
        %1524 = vmatpush1.bf16.msra.mxu0 0
        %1525 = vmatprep.subr.bf16.mxu0 0
        %1526 = vmatpush1.bf16.msra.mxu0 0
        %1527 = vmatprep.subr.bf16.mxu0 0
        %1528 = vmatpush1.bf16.msra.mxu0 0
        %1529 = vmatprep.subr.bf16.mxu0 0
        %1530 = vmatpush1.bf16.msra.mxu0 %v888
        %1531 = vmatprep.subr.bf16.mxu0 0
        %1532 = vmatpush1.bf16.msra.mxu0 %v887
        %1533 = vmatprep.subr.bf16.mxu0 0
        %1534 = vmatpush1.bf16.msra.mxu0 %v886
        %1535 = vmatprep.subr.bf16.mxu0 0
        %1536 = vmatpush1.bf16.msra.mxu0 %v885
        %1537 = vmatprep.subr.bf16.mxu0 0
        %1538 = vmatpush2.bf16.msra.mxu0 0
        %1539 = vmatprep.subr.bf16.mxu0 0
        %1540 = vmatpush2.bf16.msra.mxu0 0
        %1541 = vmatprep.subr.bf16.mxu0 0
        %1542 = vmatpush2.bf16.msra.mxu0 0
        %1543 = vmatprep.subr.bf16.mxu0 0
        %1544 = vmatpush2.bf16.msra.mxu0 0
        %1545 = vmatprep.subr.bf16.mxu0 0
        %1546 = vmatpush2.bf16.msra.mxu0 0
        %1547 = vmatprep.subr.bf16.mxu0 0
        %1548 = vmatpush2.bf16.msra.mxu0 0
        %1549 = vmatprep.subr.bf16.mxu0 0
        %1550 = vmatpush2.bf16.msra.mxu0 0
        %1551 = vmatprep.subr.bf16.mxu0 0
        %1552 = vmatpush2.bf16.msra.mxu0 0
        %1553 = vmatprep.mubr.bf16.mxu0 0
        %1554 = vmatmul.mubr.bf16.gmra.mxu0 %v1519
        %v1555 = vpop.f32.mrf.mxu0
        %v1556 = vadd.f32 0.0, %v1555
        %v1557 = vpop.f32.mrf.mxu0
        %v1558 = vpop.f32.mrf.mxu0
        %v1559 = vadd.f32 0.0, %v1558
        %v1560 = vpop.f32.mrf.mxu0
        %1561 = vdwg.mxu0
        %v1562 = vpack.c.bf16 %v1559, %v1556
        %s1563 = scalar_lea.vmem %s6, 24
        %v1564 = vld [vmem:[%s1563] sm:$0xf]
        %v1566 = vsel %vm998, %v1562, 0
        %v1569 = vsel %vm1002, %v1564, 0
        %1571 = vmatprep.subr.bf16.mxu0 0
        %1572 = vmatpush1.bf16.msra.mxu0 0
        %1573 = vmatprep.subr.bf16.mxu0 0
        %1574 = vmatpush1.bf16.msra.mxu0 0
        %1575 = vmatprep.subr.bf16.mxu0 0
        %1576 = vmatpush1.bf16.msra.mxu0 0
        %1577 = vmatprep.subr.bf16.mxu0 0
        %1578 = vmatpush1.bf16.msra.mxu0 0
        %1579 = vmatprep.subr.bf16.mxu0 0
        %1580 = vmatpush1.bf16.msra.mxu0 0
        %1581 = vmatprep.subr.bf16.mxu0 0
        %1582 = vmatpush1.bf16.msra.mxu0 0
        %1583 = vmatprep.subr.bf16.mxu0 0
        %1584 = vmatpush1.bf16.msra.mxu0 0
        %1585 = vmatprep.subr.bf16.mxu0 0
        %1586 = vmatpush1.bf16.msra.mxu0 %v1569
        %1587 = vmatprep.subr.bf16.mxu0 0
        %1588 = vmatpush2.bf16.msra.mxu0 0
        %1589 = vmatprep.subr.bf16.mxu0 0
        %1590 = vmatpush2.bf16.msra.mxu0 0
        %1591 = vmatprep.subr.bf16.mxu0 0
        %1592 = vmatpush2.bf16.msra.mxu0 0
        %1593 = vmatprep.subr.bf16.mxu0 0
        %1594 = vmatpush2.bf16.msra.mxu0 0
        %1595 = vmatprep.subr.bf16.mxu0 0
        %1596 = vmatpush2.bf16.msra.mxu0 0
        %1597 = vmatprep.subr.bf16.mxu0 0
        %1598 = vmatpush2.bf16.msra.mxu0 0
        %1599 = vmatprep.subr.bf16.mxu0 0
        %1600 = vmatpush2.bf16.msra.mxu0 0
        %1601 = vmatprep.subr.bf16.mxu0 0
        %1602 = vmatpush2.bf16.msra.mxu0 0
        %1603 = vmatprep.mubr.bf16.mxu0 0
        %1604 = vmatmul.mubr.bf16.gmra.mxu0 %v1566
        %v1605 = vpop.f32.mrf.mxu0
        %v1606 = vadd.f32 0.0, %v1605
        %v1607 = vpop.f32.mrf.mxu0
        %v1608 = vpop.f32.mrf.mxu0
        %v1609 = vadd.f32 0.0, %v1608
        %v1610 = vpop.f32.mrf.mxu0
        %1611 = vdwg.mxu0
        %v1612 = vadd.f32 %v1508, %v1606
        %v1613 = vadd.f32 %v1509, %v1609
        %s1614 = scalar_lea.vmem %s5, 56
        %v1615 = vld [vmem:[%s1614] sm:$0xf]
        %v1616 = vld [vmem:[%s1614 + $0x4] sm:$0xf]
        %v1619 = vunpack.c.l.b16 %v1615
        %v1620 = vunpack.c.l.b16 %v1616
        %v1621 = vpack.c.b16 %v1620, %v1619
        %v1623 = vsel %vm896, %v1621, 0
        %1625 = vmatprep.subr.bf16.mxu0 0
        %1626 = vmatpush1.bf16.msra.mxu0 0
        %1627 = vmatprep.subr.bf16.mxu0 0
        %1628 = vmatpush1.bf16.msra.mxu0 0
        %1629 = vmatprep.subr.bf16.mxu0 0
        %1630 = vmatpush1.bf16.msra.mxu0 0
        %1631 = vmatprep.subr.bf16.mxu0 0
        %1632 = vmatpush1.bf16.msra.mxu0 0
        %1633 = vmatprep.subr.bf16.mxu0 0
        %1634 = vmatpush1.bf16.msra.mxu0 %v888
        %1635 = vmatprep.subr.bf16.mxu0 0
        %1636 = vmatpush1.bf16.msra.mxu0 %v887
        %1637 = vmatprep.subr.bf16.mxu0 0
        %1638 = vmatpush1.bf16.msra.mxu0 %v886
        %1639 = vmatprep.subr.bf16.mxu0 0
        %1640 = vmatpush1.bf16.msra.mxu0 %v885
        %1641 = vmatprep.subr.bf16.mxu0 0
        %1642 = vmatpush2.bf16.msra.mxu0 0
        %1643 = vmatprep.subr.bf16.mxu0 0
        %1644 = vmatpush2.bf16.msra.mxu0 0
        %1645 = vmatprep.subr.bf16.mxu0 0
        %1646 = vmatpush2.bf16.msra.mxu0 0
        %1647 = vmatprep.subr.bf16.mxu0 0
        %1648 = vmatpush2.bf16.msra.mxu0 0
        %1649 = vmatprep.subr.bf16.mxu0 0
        %1650 = vmatpush2.bf16.msra.mxu0 0
        %1651 = vmatprep.subr.bf16.mxu0 0
        %1652 = vmatpush2.bf16.msra.mxu0 0
        %1653 = vmatprep.subr.bf16.mxu0 0
        %1654 = vmatpush2.bf16.msra.mxu0 0
        %1655 = vmatprep.subr.bf16.mxu0 0
        %1656 = vmatpush2.bf16.msra.mxu0 0
        %1657 = vmatprep.mubr.bf16.mxu0 0
        %1658 = vmatmul.mubr.bf16.gmra.mxu0 %v1623
        %v1659 = vpop.f32.mrf.mxu0
        %v1660 = vadd.f32 0.0, %v1659
        %v1661 = vpop.f32.mrf.mxu0
        %v1662 = vpop.f32.mrf.mxu0
        %v1663 = vadd.f32 0.0, %v1662
        %v1664 = vpop.f32.mrf.mxu0
        %1665 = vdwg.mxu0
        %v1666 = vpack.c.bf16 %v1663, %v1660
        %s1667 = scalar_lea.vmem %s6, 28
        %v1668 = vld [vmem:[%s1667] sm:$0xf]
        %v1670 = vsel %vm998, %v1666, 0
        %v1673 = vsel %vm1002, %v1668, 0
        %1675 = vmatprep.subr.bf16.mxu0 0
        %1676 = vmatpush1.bf16.msra.mxu0 0
        %1677 = vmatprep.subr.bf16.mxu0 0
        %1678 = vmatpush1.bf16.msra.mxu0 0
        %1679 = vmatprep.subr.bf16.mxu0 0
        %1680 = vmatpush1.bf16.msra.mxu0 0
        %1681 = vmatprep.subr.bf16.mxu0 0
        %1682 = vmatpush1.bf16.msra.mxu0 0
        %1683 = vmatprep.subr.bf16.mxu0 0
        %1684 = vmatpush1.bf16.msra.mxu0 0
        %1685 = vmatprep.subr.bf16.mxu0 0
        %1686 = vmatpush1.bf16.msra.mxu0 0
        %1687 = vmatprep.subr.bf16.mxu0 0
        %1688 = vmatpush1.bf16.msra.mxu0 0
        %1689 = vmatprep.subr.bf16.mxu0 0
        %1690 = vmatpush1.bf16.msra.mxu0 %v1673
        %1691 = vmatprep.subr.bf16.mxu0 0
        %1692 = vmatpush2.bf16.msra.mxu0 0
        %1693 = vmatprep.subr.bf16.mxu0 0
        %1694 = vmatpush2.bf16.msra.mxu0 0
        %1695 = vmatprep.subr.bf16.mxu0 0
        %1696 = vmatpush2.bf16.msra.mxu0 0
        %1697 = vmatprep.subr.bf16.mxu0 0
        %1698 = vmatpush2.bf16.msra.mxu0 0
        %1699 = vmatprep.subr.bf16.mxu0 0
        %1700 = vmatpush2.bf16.msra.mxu0 0
        %1701 = vmatprep.subr.bf16.mxu0 0
        %1702 = vmatpush2.bf16.msra.mxu0 0
        %1703 = vmatprep.subr.bf16.mxu0 0
        %1704 = vmatpush2.bf16.msra.mxu0 0
        %1705 = vmatprep.subr.bf16.mxu0 0
        %1706 = vmatpush2.bf16.msra.mxu0 0
        %1707 = vmatprep.mubr.bf16.mxu0 0
        %1708 = vmatmul.mubr.bf16.gmra.mxu0 %v1670
        %v1709 = vpop.f32.mrf.mxu0
        %v1710 = vadd.f32 0.0, %v1709
        %v1711 = vpop.f32.mrf.mxu0
        %v1712 = vpop.f32.mrf.mxu0
        %v1713 = vadd.f32 0.0, %v1712
        %v1714 = vpop.f32.mrf.mxu0
        %1715 = vdwg.mxu0
        %v1716 = vadd.f32 %v1612, %v1710
        %v1717 = vadd.f32 %v1613, %v1713
        %s1718 = scalar_lea.vmem %s5, 64
        %v1719 = vld [vmem:[%s1718] sm:$0xf]
        %v1720 = vld [vmem:[%s1718 + $0x4] sm:$0xf]
        %v1723 = vunpack.c.l.b16 %v1719
        %v1724 = vunpack.c.l.b16 %v1720
        %v1725 = vpack.c.b16 %v1724, %v1723
        %v1727 = vsel %vm896, %v1725, 0
        %1729 = vmatprep.subr.bf16.mxu0 0
        %1730 = vmatpush1.bf16.msra.mxu0 0
        %1731 = vmatprep.subr.bf16.mxu0 0
        %1732 = vmatpush1.bf16.msra.mxu0 0
        %1733 = vmatprep.subr.bf16.mxu0 0
        %1734 = vmatpush1.bf16.msra.mxu0 0
        %1735 = vmatprep.subr.bf16.mxu0 0
        %1736 = vmatpush1.bf16.msra.mxu0 0
        %1737 = vmatprep.subr.bf16.mxu0 0
        %1738 = vmatpush1.bf16.msra.mxu0 %v888
        %1739 = vmatprep.subr.bf16.mxu0 0
        %1740 = vmatpush1.bf16.msra.mxu0 %v887
        %1741 = vmatprep.subr.bf16.mxu0 0
        %1742 = vmatpush1.bf16.msra.mxu0 %v886
        %1743 = vmatprep.subr.bf16.mxu0 0
        %1744 = vmatpush1.bf16.msra.mxu0 %v885
        %1745 = vmatprep.subr.bf16.mxu0 0
        %1746 = vmatpush2.bf16.msra.mxu0 0
        %1747 = vmatprep.subr.bf16.mxu0 0
        %1748 = vmatpush2.bf16.msra.mxu0 0
        %1749 = vmatprep.subr.bf16.mxu0 0
        %1750 = vmatpush2.bf16.msra.mxu0 0
        %1751 = vmatprep.subr.bf16.mxu0 0
        %1752 = vmatpush2.bf16.msra.mxu0 0
        %1753 = vmatprep.subr.bf16.mxu0 0
        %1754 = vmatpush2.bf16.msra.mxu0 0
        %1755 = vmatprep.subr.bf16.mxu0 0
        %1756 = vmatpush2.bf16.msra.mxu0 0
        %1757 = vmatprep.subr.bf16.mxu0 0
        %1758 = vmatpush2.bf16.msra.mxu0 0
        %1759 = vmatprep.subr.bf16.mxu0 0
        %1760 = vmatpush2.bf16.msra.mxu0 0
        %1761 = vmatprep.mubr.bf16.mxu0 0
        %1762 = vmatmul.mubr.bf16.gmra.mxu0 %v1727
        %v1763 = vpop.f32.mrf.mxu0
        %v1764 = vadd.f32 0.0, %v1763
        %v1765 = vpop.f32.mrf.mxu0
        %v1766 = vpop.f32.mrf.mxu0
        %v1767 = vadd.f32 0.0, %v1766
        %v1768 = vpop.f32.mrf.mxu0
        %1769 = vdwg.mxu0
        %v1770 = vpack.c.bf16 %v1767, %v1764
        %s1771 = scalar_lea.vmem %s6, 32
        %v1772 = vld [vmem:[%s1771] sm:$0xf]
        %v1774 = vsel %vm998, %v1770, 0
        %v1777 = vsel %vm1002, %v1772, 0
        %1779 = vmatprep.subr.bf16.mxu0 0
        %1780 = vmatpush1.bf16.msra.mxu0 0
        %1781 = vmatprep.subr.bf16.mxu0 0
        %1782 = vmatpush1.bf16.msra.mxu0 0
        %1783 = vmatprep.subr.bf16.mxu0 0
        %1784 = vmatpush1.bf16.msra.mxu0 0
        %1785 = vmatprep.subr.bf16.mxu0 0
        %1786 = vmatpush1.bf16.msra.mxu0 0
        %1787 = vmatprep.subr.bf16.mxu0 0
        %1788 = vmatpush1.bf16.msra.mxu0 0
        %1789 = vmatprep.subr.bf16.mxu0 0
        %1790 = vmatpush1.bf16.msra.mxu0 0
        %1791 = vmatprep.subr.bf16.mxu0 0
        %1792 = vmatpush1.bf16.msra.mxu0 0
        %1793 = vmatprep.subr.bf16.mxu0 0
        %1794 = vmatpush1.bf16.msra.mxu0 %v1777
        %1795 = vmatprep.subr.bf16.mxu0 0
        %1796 = vmatpush2.bf16.msra.mxu0 0
        %1797 = vmatprep.subr.bf16.mxu0 0
        %1798 = vmatpush2.bf16.msra.mxu0 0
        %1799 = vmatprep.subr.bf16.mxu0 0
        %1800 = vmatpush2.bf16.msra.mxu0 0
        %1801 = vmatprep.subr.bf16.mxu0 0
        %1802 = vmatpush2.bf16.msra.mxu0 0
        %1803 = vmatprep.subr.bf16.mxu0 0
        %1804 = vmatpush2.bf16.msra.mxu0 0
        %1805 = vmatprep.subr.bf16.mxu0 0
        %1806 = vmatpush2.bf16.msra.mxu0 0
        %1807 = vmatprep.subr.bf16.mxu0 0
        %1808 = vmatpush2.bf16.msra.mxu0 0
        %1809 = vmatprep.subr.bf16.mxu0 0
        %1810 = vmatpush2.bf16.msra.mxu0 0
        %1811 = vmatprep.mubr.bf16.mxu0 0
        %1812 = vmatmul.mubr.bf16.gmra.mxu0 %v1774
        %v1813 = vpop.f32.mrf.mxu0
        %v1814 = vadd.f32 0.0, %v1813
        %v1815 = vpop.f32.mrf.mxu0
        %v1816 = vpop.f32.mrf.mxu0
        %v1817 = vadd.f32 0.0, %v1816
        %v1818 = vpop.f32.mrf.mxu0
        %1819 = vdwg.mxu0
        %v1820 = vadd.f32 %v1716, %v1814
        %v1821 = vadd.f32 %v1717, %v1817
        %v1822 = vld [vmem:[%s7] sm:$0x1]
        %v1824 = vlaneseq
        %v1825 = vshrl.u32 %v1824, 7
        %v1826 = vsub.s32 0, %v1825
        %v1827 = vrot.slane %v1822, %v1826
        %v1829 = vadd.f32 %v1820, %v1827
        %v1830 = vadd.f32 %v1821, %v1827
        %v1831 = vmax.f32 %v1829, 0.0
        %v1832 = vmax.f32 %v1830, 0.0
        %v1833 = vpack.c.bf16 %v1832, %v1831
        %v1834 = vld [vmem:[%s8] sm:$0xf]
        %v1835 = vld [vmem:[%s9] sm:$0xf]
        %v1836 = vld [vmem:[%s9 + $0x4] sm:$0xf]
        %v1839 = vunpack.c.l.b16 %v1835
        %v1840 = vunpack.c.l.b16 %v1836
        %v1841 = vpack.c.b16 %v1840, %v1839
        %v1847 = vsel %vm896, %v1841, 0
        %1849 = vmatprep.subr.bf16.mxu0 0
        %1850 = vmatpush1.bf16.msra.mxu0 0
        %1851 = vmatprep.subr.bf16.mxu0 0
        %1852 = vmatpush1.bf16.msra.mxu0 0
        %1853 = vmatprep.subr.bf16.mxu0 0
        %1854 = vmatpush1.bf16.msra.mxu0 0
        %1855 = vmatprep.subr.bf16.mxu0 0
        %1856 = vmatpush1.bf16.msra.mxu0 0
        %1857 = vmatprep.subr.bf16.mxu0 0
        %1858 = vmatpush1.bf16.msra.mxu0 %v561
        %1859 = vmatprep.subr.bf16.mxu0 0
        %1860 = vmatpush1.bf16.msra.mxu0 %v560
        %1861 = vmatprep.subr.bf16.mxu0 0
        %1862 = vmatpush1.bf16.msra.mxu0 %v559
        %1863 = vmatprep.subr.bf16.mxu0 0
        %1864 = vmatpush1.bf16.msra.mxu0 %v558
        %1865 = vmatprep.subr.bf16.mxu0 0
        %1866 = vmatpush2.bf16.msra.mxu0 0
        %1867 = vmatprep.subr.bf16.mxu0 0
        %1868 = vmatpush2.bf16.msra.mxu0 0
        %1869 = vmatprep.subr.bf16.mxu0 0
        %1870 = vmatpush2.bf16.msra.mxu0 0
        %1871 = vmatprep.subr.bf16.mxu0 0
        %1872 = vmatpush2.bf16.msra.mxu0 0
        %1873 = vmatprep.subr.bf16.mxu0 0
        %1874 = vmatpush2.bf16.msra.mxu0 0
        %1875 = vmatprep.subr.bf16.mxu0 0
        %1876 = vmatpush2.bf16.msra.mxu0 0
        %1877 = vmatprep.subr.bf16.mxu0 0
        %1878 = vmatpush2.bf16.msra.mxu0 0
        %1879 = vmatprep.subr.bf16.mxu0 0
        %1880 = vmatpush2.bf16.msra.mxu0 0
        %1881 = vmatprep.mubr.bf16.mxu0 0
        %1882 = vmatmul.mubr.bf16.gmra.mxu0 %v1847
        %v1883 = vpop.f32.mrf.mxu0
        %v1884 = vadd.f32 0.0, %v1883
        %v1885 = vpop.f32.mrf.mxu0
        %v1886 = vpop.f32.mrf.mxu0
        %v1887 = vadd.f32 0.0, %v1886
        %v1888 = vpop.f32.mrf.mxu0
        %1889 = vdwg.mxu0
        %v1890 = vpack.c.bf16 %v1887, %v1884
        %v1891 = vld [vmem:[%s10] sm:$0x3]
        %v1893 = vsel %vm562, %v1890, 0
        %v1896 = vsel %vm575, %v1891, 0
        %1898 = vmatprep.subr.bf16.mxu0 0
        %1899 = vmatpush1.bf16.msra.mxu0 0
        %1900 = vmatprep.subr.bf16.mxu0 0
        %1901 = vmatpush1.bf16.msra.mxu0 0
        %1902 = vmatprep.subr.bf16.mxu0 0
        %1903 = vmatpush1.bf16.msra.mxu0 0
        %1904 = vmatprep.subr.bf16.mxu0 0
        %1905 = vmatpush1.bf16.msra.mxu0 0
        %1906 = vmatprep.subr.bf16.mxu0 0
        %1907 = vmatpush1.bf16.msra.mxu0 0
        %1908 = vmatprep.subr.bf16.mxu0 0
        %1909 = vmatpush1.bf16.msra.mxu0 0
        %1910 = vmatprep.subr.bf16.mxu0 0
        %1911 = vmatpush1.bf16.msra.mxu0 0
        %1912 = vmatprep.subr.bf16.mxu0 0
        %1913 = vmatpush1.bf16.msra.mxu0 %v1896
        %1914 = vmatprep.subr.bf16.mxu0 0
        %1915 = vmatpush2.bf16.msra.mxu0 0
        %1916 = vmatprep.subr.bf16.mxu0 0
        %1917 = vmatpush2.bf16.msra.mxu0 0
        %1918 = vmatprep.subr.bf16.mxu0 0
        %1919 = vmatpush2.bf16.msra.mxu0 0
        %1920 = vmatprep.subr.bf16.mxu0 0
        %1921 = vmatpush2.bf16.msra.mxu0 0
        %1922 = vmatprep.subr.bf16.mxu0 0
        %1923 = vmatpush2.bf16.msra.mxu0 0
        %1924 = vmatprep.subr.bf16.mxu0 0
        %1925 = vmatpush2.bf16.msra.mxu0 0
        %1926 = vmatprep.subr.bf16.mxu0 0
        %1927 = vmatpush2.bf16.msra.mxu0 0
        %1928 = vmatprep.subr.bf16.mxu0 0
        %1929 = vmatpush2.bf16.msra.mxu0 0
        %1930 = vmatprep.mubr.bf16.mxu0 0
        %1931 = vmatmul.mubr.bf16.gmra.mxu0 %v1893
        %v1932 = vpop.f32.mrf.mxu0
        %v1933 = vadd.f32 0.0, %v1932
        %v1934 = vpop.f32.mrf.mxu0
        %v1935 = vpop.f32.mrf.mxu0
        %v1936 = vadd.f32 0.0, %v1935
        %v1937 = vpop.f32.mrf.mxu0
        %1938 = vdwg.mxu0
        %v1940 = vsel %vm998, %v1833, 0
        %v1943 = vsel %vm1002, %v1834, 0
        %1945 = vmatprep.subr.bf16.mxu0 0
        %1946 = vmatpush1.bf16.msra.mxu0 0
        %1947 = vmatprep.subr.bf16.mxu0 0
        %1948 = vmatpush1.bf16.msra.mxu0 0
        %1949 = vmatprep.subr.bf16.mxu0 0
        %1950 = vmatpush1.bf16.msra.mxu0 0
        %1951 = vmatprep.subr.bf16.mxu0 0
        %1952 = vmatpush1.bf16.msra.mxu0 0
        %1953 = vmatprep.subr.bf16.mxu0 0
        %1954 = vmatpush1.bf16.msra.mxu0 0
        %1955 = vmatprep.subr.bf16.mxu0 0
        %1956 = vmatpush1.bf16.msra.mxu0 0
        %1957 = vmatprep.subr.bf16.mxu0 0
        %1958 = vmatpush1.bf16.msra.mxu0 0
        %1959 = vmatprep.subr.bf16.mxu0 0
        %1960 = vmatpush1.bf16.msra.mxu0 %v1943
        %1961 = vmatprep.subr.bf16.mxu0 0
        %1962 = vmatpush2.bf16.msra.mxu0 0
        %1963 = vmatprep.subr.bf16.mxu0 0
        %1964 = vmatpush2.bf16.msra.mxu0 0
        %1965 = vmatprep.subr.bf16.mxu0 0
        %1966 = vmatpush2.bf16.msra.mxu0 0
        %1967 = vmatprep.subr.bf16.mxu0 0
        %1968 = vmatpush2.bf16.msra.mxu0 0
        %1969 = vmatprep.subr.bf16.mxu0 0
        %1970 = vmatpush2.bf16.msra.mxu0 0
        %1971 = vmatprep.subr.bf16.mxu0 0
        %1972 = vmatpush2.bf16.msra.mxu0 0
        %1973 = vmatprep.subr.bf16.mxu0 0
        %1974 = vmatpush2.bf16.msra.mxu0 0
        %1975 = vmatprep.subr.bf16.mxu0 0
        %1976 = vmatpush2.bf16.msra.mxu0 0
        %1977 = vmatprep.mubr.bf16.mxu0 0
        %1978 = vmatmul.mubr.bf16.gmra.mxu0 %v1940
        %v1979 = vpop.f32.mrf.mxu0
        %v1980 = vadd.f32 %v1933, %v1979
        %v1981 = vpop.f32.mrf.mxu0
        %v1982 = vpop.f32.mrf.mxu0
        %v1983 = vadd.f32 %v1936, %v1982
        %v1984 = vpop.f32.mrf.mxu0
        %1985 = vdwg.mxu0
        %v1986 = vld [vmem:[%s11] sm:$0x1]
        %v1988 = vlaneseq
        %v1989 = vshrl.u32 %v1988, 7
        %v1990 = vsub.s32 0, %v1989
        %v1991 = vrot.slane %v1986, %v1990
        %v1993 = vadd.f32 %v1980, %v1991
        %v1994 = vadd.f32 %v1983, %v1991
        %v1995 = vmax.f32 %v1993, 0.0
        %v1996 = vmax.f32 %v1994, 0.0
        %vm1997 = vcmask 130048
        %1998 = vst.msk [vmem:[%s490] sm:$0xff] %vm1997, %v1995
        %1999 = vst.msk [vmem:[%s490 + $0x8] sm:$0xff] %vm1997, %v1996
        %s2000 = sand.u32 %s325, 1
        %s2001 = scalar_lea.sflag [#allocation3], %s2000
        %s2002 = sand.u32 %s325, 1
        %s2003 = smul.addr %s2002, 16
        %s2004 = scalar_lea.vmem [#allocation2], %s2003
        // Predicated region
        $region69: #{res_block_forward.1} parent=67 // pred_check
          %p2005 = pneg %p335
        $region70: #{res_block_forward.1} parent=67 // pred_check_branch
          %2007 = sbr.rel (%p2005) target = $region72
        $region71: #{res_block_forward.1} parent=67 // pred_region
          %s2009 = ssub.s32 256, 256
          %2010 = vsyncadd %s2001, %s2009
          %s2011 = smul.addr %s31, 2
          %s2012 = smul.addr %s30, 8
          %s2013 = sadd.s32 %s2011, %s2012
          %s2014 = smul.addr %s2013, 128
          %s2015 = scalar_lea.hbm %s12, %s2014
          %s2016 = sshll.u32 %s2004, 4
          %s2017 = int_to_ptr.vmem [resolvable:$true] %s2016
          %2022 = dma.vmem_to_hbm [thread:$0]  %s2017, 256, %s2015, %s2001, 128, 128, 8
        $region72: #{res_block_forward.1} parent=67 // pred_fallthru
          _
      $region68: #{res_block_forward.1} parent=5 // pred_fallthru
        _
      %p2023 = scmp.le.s32.totalorder 2, %s21
      // Predicated region
      $region73: #{res_block_forward.1} parent=5 // pred_check
        %p2024 = pneg %p2023
      $region74: #{res_block_forward.1} parent=5 // pred_check_branch
        %2026 = sbr.rel (%p2024) target = $region76
      $region75: #{res_block_forward.1} parent=5 // pred_region
        %s2027 = ssub.s32 %s21, 2
        // Predicated region
        $region77: #{res_block_forward.1} parent=75 // pred_check
          %p2028 = pneg %p341
        $region78: #{res_block_forward.1} parent=75 // pred_check_branch
          %2030 = sbr.rel (%p2028) target = $region80
        $region79: #{res_block_forward.1} parent=75 // pred_region
          %s2031 = sand.u32 %s326, 1
          %s2032 = scalar_lea.sflag [#allocation3], %s2031
          %s2033 = sand.u32 %s326, 1
          %s2034 = smul.addr %s2033, 16
          %s2035 = scalar_lea.vmem [#allocation2], %s2034
          %2036 = dma.done %s2032, 256
        $region80: #{res_block_forward.1} parent=75 // pred_fallthru
          _
      $region76: #{res_block_forward.1} parent=5 // pred_fallthru
        _
    $region6: #{res_block_forward.1} parent=1 // loop_footer
      %s25 = sadd.s32 1, %s21
    $region7: #{res_block_forward.1} parent=1 // loop_footer_branch
      %20 = sbr.rel target = $region3
    $region8: #{res_block_forward.1} parent=1 // loop_exit
      _
    %2037 = vsyncpa [#allocation3], 1
    %s2038 = scalar_lea.sflag [#allocation3], 1
    %2039 = vsyncpa %s2038, 1

</llo_original>
